<compile_context>
chip_gen: v6e
topology: v6e:2x2x1
jax: 0.10.0
libtpu: 0.0.40
codegen_flags: <defaults>
</compile_context>

<pallas_src>
import math
from functools import partial

import jax
import jax.numpy as jnp
from jax.experimental import pallas as pl
from jax.experimental.pallas import tpu as pltpu


# ----------------------------- small helpers ---------------------------------

def _round_up(x, m):
    return (x + m - 1) // m * m


def _cdiv(a, b):
    return -(-a // b)


def _normalize_stride(stride):
    if isinstance(stride, (tuple, list)):
        if len(stride) == 1:
            return int(stride[0]), int(stride[0])
        return int(stride[0]), int(stride[1])
    return int(stride), int(stride)


def _same_pad_amounts(H, W, kh, kw, sh, sw):
    """Mirrors the PyTorch module's forward() exactly (no clamping: kernel < stride
    yields a negative pad, i.e. a crop, exactly like F.pad with negative values)."""
    v_step = math.ceil(H / sh)
    h_step = math.ceil(W / sw)
    v_cover = sh * (v_step - 1) + 1 + (kh - 1)
    h_cover = sw * (h_step - 1) + 1 + (kw - 1)
    extra_v = v_cover - H
    extra_h = h_cover - W
    top = extra_v // 2
    bottom = extra_v - top
    left = extra_h // 2
    right = extra_h - left
    return (top, bottom), (left, right)


def _pad_same(x, kh, kw, sh, sw):
    H, W = x.shape[-2:]
    (top, bottom), (left, right) = _same_pad_amounts(H, W, kh, kw, sh, sw)
    return jax.lax.pad(x, jnp.array(0, x.dtype),
                       ((0, 0, 0), (0, 0, 0), (top, bottom, 0), (left, right, 0)))


def _vmem_params():
    """(vmem_limit_bytes, per-kernel working-set budget) tuned per TPU generation."""
    cap = 128 * 1024 * 1024
    try:
        info = pltpu.get_tpu_info()
        cap = int(getattr(info, "vmem_capacity_bytes", cap))
    except Exception:
        pass
    if cap <= 64 * 1024 * 1024:                     # v7x-class TC: 64 MiB physical VMEM
        return 40 * 1024 * 1024, 18 * 1024 * 1024
    return 96 * 1024 * 1024, 48 * 1024 * 1024       # v5e / v6e: 128 MiB physical VMEM


# ------------------- Path A: stride-1 direct (in-kernel im2col) ---------------

def _direct_conv(xp, weight, bias, *, groups, compute_dtype, out_dtype,
                 vmem_limit, budget):
    """Stride-1 conv on the padded input as flat-spatial tap matmuls (no HBM im2col)."""
    B, C, Hp, Wp = xp.shape
    C_out, cin_g, Kh, Kw = weight.shape
    G = groups
    cout_g = C_out // G
    H_out = Hp - Kh + 1
    W_out = Wp - Kw + 1
    cb = jnp.dtype(compute_dtype).itemsize
    ob = jnp.dtype(out_dtype).itemsize

    halo = (Kh - 1) * Wp + (Kw - 1)
    n_target = H_out * Wp          # flat outputs we must cover (incl. Kw-1 garbage cols/row)

    # ---- pick the flat-output tile L (lane dim, multiple of 128) -------------
    w_bytes = 2 * Kh * Kw * cout_g * cin_g * cb
    n_cap = _round_up(n_target, 128)
    cands = sorted({min(c, n_cap) for c in (4096, 2048, 1024, 512, 256, 128)}, reverse=True)
    L = None
    for cand in cands:
        blen_c = _round_up(cand + halo, 128)
        n_t_c = _cdiv(n_target, cand)
        lx_c = _round_up((n_t_c - 1) * cand + blen_c, 128)
        work = (2 * cin_g * lx_c * cb        # resident input per (g,b), double-buffered
                + w_bytes                    # weights (resident per group)
                + 2 * cout_g * cand * ob     # output block, double-buffered
                + cout_g * cand * 4          # f32 accumulator scratch
                + 2 * cin_g * blen_c * cb)   # in-kernel band value slack
        if work <= budget:
            L = cand
            break
    if L is None:
        return None                          # does not fit VMEM -> caller falls back

    # v7x has 2 TensorCores: make sure the parallel grid has >= 2 steps when B*G == 1.
    if B * G == 1 and _cdiv(n_target, L) < 2 and n_target > 128:
        L = _round_up(_cdiv(n_target, 2), 128)

    n_t = _cdiv(n_target, L)
    blen = _round_up(L + halo, 128)
    LX = _round_up((n_t - 1) * L + blen, 128)
    NFp = n_t * L

    # ---- flat layouts (all in compute dtype) ----------------------------------
    x_flat = xp.astype(compute_dtype).reshape(B, G, cin_g, Hp * Wp)
    x_flat = jnp.pad(x_flat, ((0, 0), (0, 0), (0, 0), (0, LX - Hp * Wp)))

    # weights as (G, Kh*Kw, cout_g, cin_g): taps indexed on a major dim in the kernel
    w_taps = weight.reshape(G, cout_g, cin_g, Kh, Kw)
    w_taps = jnp.transpose(w_taps, (0, 3, 4, 1, 2)).reshape(G, Kh * Kw, cout_g, cin_g)
    w_taps = w_taps.astype(compute_dtype)

    if bias is None:
        bias_arr = jnp.zeros((G, cout_g, 1), jnp.float32)
    else:
        bias_arr = bias.astype(jnp.float32).reshape(G, cout_g, 1)

    tap_offsets = tuple(ih * Wp + iw for ih in range(Kh) for iw in range(Kw))

    def kernel(x_ref, w_ref, b_ref, o_ref, acc_ref):
        t = pl.program_id(2)
        start = pl.multiple_of(t * L, 128)
        band = x_ref[0, 0, :, pl.ds(start, blen)]              # (cin_g, blen)
        acc_ref[...] = jnp.zeros_like(acc_ref)
        for tap, off in enumerate(tap_offsets):                # static K*K tap loop
            acc_ref[...] += jnp.dot(w_ref[0, tap], band[:, off:off + L],
                                    preferred_element_type=jnp.float32)
        o_ref[0, 0] = (acc_ref[...] + b_ref[0]).astype(o_ref.dtype)

    flops = 2 * B * G * cout_g * cin_g * Kh * Kw * NFp
    bytes_accessed = (x_flat.size * cb + w_taps.size * cb + bias_arr.size * 4
                      + B * G * cout_g * NFp * ob)

    out = pl.pallas_call(
        kernel,
        out_shape=jax.ShapeDtypeStruct((B, G, cout_g, NFp), out_dtype),
        grid=(G, B, n_t),
        in_specs=[
            pl.BlockSpec((1, 1, cin_g, LX), lambda g, b, t: (b, g, 0, 0)),
            pl.BlockSpec((1, Kh * Kw, cout_g, cin_g), lambda g, b, t: (g, 0, 0, 0)),
            pl.BlockSpec((1, cout_g, 1), lambda g, b, t: (g, 0, 0)),
        ],
        out_specs=pl.BlockSpec((1, 1, cout_g, L), lambda g, b, t: (b, g, 0, t)),
        scratch_shapes=[pltpu.VMEM((cout_g, L), jnp.float32)],
        compiler_params=pltpu.CompilerParams(
            dimension_semantics=("parallel", "parallel", "parallel"),
            vmem_limit_bytes=vmem_limit),
        cost_estimate=pl.CostEstimate(flops=flops, transcendentals=0,
                                      bytes_accessed=bytes_accessed),
    )(x_flat, w_taps, bias_arr)

    # drop garbage columns / tail, reshape straight back to NCHW (no transpose)
    out = out[..., :H_out * Wp].reshape(B, C_out, H_out, Wp)[..., :W_out]
    return out


# ------------------- Path D: stride-1 depthwise (VPU tap MAC) -----------------

def _depthwise_conv(xp, weight, bias, *, compute_dtype, out_dtype, vmem_limit, budget):
    """groups == C_in, multiplier 1, stride 1: per-tap VPU multiply-accumulate."""
    B, C, Hp, Wp = xp.shape
    Kh, Kw = weight.shape[-2:]
    H_out = Hp - Kh + 1
    W_out = Wp - Kw + 1
    cb = jnp.dtype(compute_dtype).itemsize
    ob = jnp.dtype(out_dtype).itemsize

    halo = (Kh - 1) * Wp + (Kw - 1)
    n_target = H_out * Wp

    L = min(2048, _round_up(n_target, 128))
    blen = _round_up(L + halo, 128)
    n_t = _cdiv(n_target, L)
    LX = _round_up((n_t - 1) * L + blen, 128)
    NFp = n_t * L

    # channel tile (sublane dim): whole channel axis if it fits, else a multiple-of-8 tile
    c_opts = [C] + [c for c in (256, 128, 64, 32, 16, 8) if c < C]
    tc = Cp = None
    for cand in c_opts:
        c_pad = C if cand == C else _round_up(C, cand)
        work = (2 * cand * LX * cb + 2 * cand * L * ob + cand * L * 4
                + 2 * Kh * Kw * cand * 4 + 2 * cand * blen * cb)
        if work <= budget:
            tc, Cp = cand, c_pad
            break
    if tc is None:
        return None

    x_flat = xp.astype(compute_dtype).reshape(B, C, Hp * Wp)
    x_flat = jnp.pad(x_flat, ((0, 0), (0, Cp - C), (0, LX - Hp * Wp)))

    KK = Kh * Kw
    w_taps = weight.reshape(C, KK).astype(jnp.float32).T[:, :, None]        # (KK, C, 1)
    w_taps = jnp.pad(w_taps, ((0, 0), (0, Cp - C), (0, 0)))

    if bias is None:
        bias_arr = jnp.zeros((Cp, 1), jnp.float32)
    else:
        bias_arr = jnp.pad(bias.astype(jnp.float32).reshape(C, 1), ((0, Cp - C), (0, 0)))

    tap_offsets = tuple(ih * Wp + iw for ih in range(Kh) for iw in range(Kw))

    def kernel(x_ref, w_ref, b_ref, o_ref, acc_ref):
        t = pl.program_id(2)
        start = pl.multiple_of(t * L, 128)
        band = x_ref[0, :, pl.ds(start, blen)]                  # (tc, blen) compute dtype
        acc_ref[...] = jnp.zeros_like(acc_ref)
        for tap, off in enumerate(tap_offsets):
            acc_ref[...] += w_ref[tap] * band[:, off:off + L].astype(jnp.float32)
        o_ref[0] = (acc_ref[...] + b_ref[...]).astype(o_ref.dtype)

    flops = 2 * B * C * KK * NFp
    bytes_accessed = (x_flat.size * cb + w_taps.size * 4 + bias_arr.size * 4
                      + B * Cp * NFp * ob)

    out = pl.pallas_call(
        kernel,
        out_shape=jax.ShapeDtypeStruct((B, Cp, NFp), out_dtype),
        grid=(Cp // tc, B, n_t),
        in_specs=[
            pl.BlockSpec((1, tc, LX), lambda c, b, t: (b, c, 0)),
            pl.BlockSpec((KK, tc, 1), lambda c, b, t: (0, c, 0)),
            pl.BlockSpec((tc, 1), lambda c, b, t: (c, 0)),
        ],
        out_specs=pl.BlockSpec((1, tc, L), lambda c, b, t: (b, c, t)),
        scratch_shapes=[pltpu.VMEM((tc, L), jnp.float32)],
        compiler_params=pltpu.CompilerParams(
            dimension_semantics=("parallel", "parallel", "parallel"),
            vmem_limit_bytes=vmem_limit),
        cost_estimate=pl.CostEstimate(flops=flops, transcendentals=0,
                                      bytes_accessed=bytes_accessed),
    )(x_flat, w_taps, bias_arr)

    out = out[:, :C, :H_out * Wp].reshape(B, C, H_out, Wp)[..., :W_out]
    return out


# ------------ Path B: fallback (stride > 1 / VMEM overflow): im2col matmul ----

def _im2col_conv(xp, weight, bias, *, groups, sh, sw, compute_dtype, out_dtype,
                 vmem_limit, budget):
    B, C, Hp, Wp = xp.shape
    C_out, cin_g, Kh, Kw = weight.shape
    G = groups
    cout_g = C_out // G
    H_out = (Hp - Kh) // sh + 1
    W_out = (Wp - Kw) // sw + 1
    HW = H_out * W_out
    CKg = cin_g * Kh * Kw
    cb = jnp.dtype(compute_dtype).itemsize
    ob = jnp.dtype(out_dtype).itemsize
    pack = 8 * (4 // cb)                            # sublane pack: 8 f32, 16 bf16, 32 i8

    # ---- choose (tile_hw, tile_k): keep the spatial tile big, tile CK instead ----
    ck_full = _round_up(CKg, pack)
    hw_cap = _round_up(HW, 128)
    tk_opts = [ck_full] if ck_full <= 1024 else [512, 256, 128]
    tile_hw, tile_k = 128, tk_opts[-1]
    done = False
    for thw in (2048, 1024, 512, 256, 128):
        if thw > hw_cap and thw != 128:
            continue
        for tk in tk_opts:
            work = (2 * tk * thw * cb + 2 * cout_g * tk * cb
                    + 2 * cout_g * thw * ob + cout_g * thw * 4)
            if work <= budget:
                tile_hw, tile_k, done = thw, tk, True
                break
        if done:
            break

    CKp = _round_up(CKg, tile_k)
    HWp = _round_up(HW, tile_hw)
    n_k = CKp // tile_k
    n_hw = HWp // tile_hw

    # ---- im2col in compute dtype.  TODO(synk): replace with an in-kernel halo-DMA
    # gather for stride > 1 so this K^2-inflated HBM intermediate disappears too.
    xc = xp.astype(compute_dtype)
    cols = []
    for ih in range(Kh):
        for iw in range(Kw):
            sl = xc[:, :, ih:ih + sh * H_out:sh, iw:iw + sw * W_out:sw]
            cols.append(sl.reshape(B, C, HW))
    patches = jnp.stack(cols, axis=2).reshape(B, G, CKg, HW)
    patches = jnp.pad(patches, ((0, 0), (0, 0), (0, CKp - CKg), (0, HWp - HW)))

    wmat = weight.reshape(G, cout_g, CKg).astype(compute_dtype)
    wmat = jnp.pad(wmat, ((0, 0), (0, 0), (0, CKp - CKg)))

    if bias is None:
        bias_arr = jnp.zeros((G, cout_g, 1), jnp.float32)
    else:
        bias_arr = bias.astype(jnp.float32).reshape(G, cout_g, 1)

    def kernel(p_ref, w_ref, b_ref, o_ref, acc_ref):
        k = pl.program_id(3)

        @pl.when(k == 0)
        def _():
            acc_ref[...] = jnp.zeros_like(acc_ref)

        acc_ref[...] += jnp.dot(w_ref[0], p_ref[0, 0],
                                preferred_element_type=jnp.float32)

        @pl.when(k == pl.num_programs(3) - 1)
        def _():
            o_ref[0, 0] = (acc_ref[...] + b_ref[0]).astype(o_ref.dtype)

    flops = 2 * B * C_out * CKg * HW
    bytes_accessed = (patches.size * cb + wmat.size * cb + bias_arr.size * 4
                      + B * C_out * HW * ob)

    out = pl.pallas_call(
        kernel,
        out_shape=jax.ShapeDtypeStruct((B, G, cout_g, HWp), out_dtype),
        grid=(G, B, n_hw, n_k),
        in_specs=[
            pl.BlockSpec((1, 1, tile_k, tile_hw), lambda g, b, s, k: (b, g, k, s)),
            pl.BlockSpec((1, cout_g, tile_k), lambda g, b, s, k: (g, 0, k)),
            pl.BlockSpec((1, cout_g, 1), lambda g, b, s, k: (g, 0, 0)),
        ],
        out_specs=pl.BlockSpec((1, 1, cout_g, tile_hw), lambda g, b, s, k: (b, g, 0, s)),
        scratch_shapes=[pltpu.VMEM((cout_g, tile_hw), jnp.float32)],
        compiler_params=pltpu.CompilerParams(
            dimension_semantics=("parallel", "parallel", "parallel", "arbitrary"),
            vmem_limit_bytes=vmem_limit),
        cost_estimate=pl.CostEstimate(flops=flops, transcendentals=0,
                                      bytes_accessed=bytes_accessed),
    )(patches, wmat, bias_arr)

    out = out[..., :HW].reshape(B, C_out, H_out, W_out)
    return out


# ----------------------------- forward wrapper --------------------------------

@partial(jax.jit, static_argnames=("stride", "groups", "compute_dtype", "out_dtype"))
def _forward(x, weight, bias, *, stride, groups, compute_dtype, out_dtype):
    B, C, H, W = x.shape
    C_out, cin_g, Kh, Kw = weight.shape
    assert C == cin_g * groups and C_out % groups == 0
    sh, sw = stride
    cout_g = C_out // groups

    # dynamic "same" padding (possibly asymmetric / negative), done in compute dtype
    xp = _pad_same(x.astype(compute_dtype), Kh, Kw, sh, sw)
    vmem_limit, budget = _vmem_params()

    out = None
    if sh == 1 and sw == 1:
        if cin_g == 1 and cout_g == 1:      # pure depthwise -> VPU path
            out = _depthwise_conv(xp, weight, bias, compute_dtype=compute_dtype,
                                  out_dtype=out_dtype, vmem_limit=vmem_limit,
                                  budget=budget)
        if out is None:                      # standard / grouped stride-1 -> direct path
            out = _direct_conv(xp, weight, bias, groups=groups,
                               compute_dtype=compute_dtype, out_dtype=out_dtype,
                               vmem_limit=vmem_limit, budget=budget)
    if out is None:                          # stride > 1 or VMEM overflow -> im2col path
        out = _im2col_conv(xp, weight, bias, groups=groups, sh=sh, sw=sw,
                           compute_dtype=compute_dtype, out_dtype=out_dtype,
                           vmem_limit=vmem_limit, budget=budget)
    return out


def conv2d_dynamic_same_padding(x, weight, bias=None, *, stride=1, groups=1,
                                compute_dtype=jnp.bfloat16, out_dtype=None):
    """x: (B, C_in, H, W) NCHW; weight: (C_out, C_in//groups, Kh, Kw); bias: (C_out,)."""
    sh, sw = _normalize_stride(stride)
    if out_dtype is None:
        out_dtype = x.dtype
    return _forward(x, weight, bias, stride=(sh, sw), groups=int(groups),
                    compute_dtype=jnp.dtype(compute_dtype),
                    out_dtype=jnp.dtype(out_dtype))


# ----------------------------- pure-JAX reference -----------------------------

def reference_forward(x, weight, bias=None, *, stride=1, groups=1):
    """Mirrors the PyTorch Conv2dDynamicSamePadding forward exactly (f32, exact conv)."""
    sh, sw = _normalize_stride(stride)
    Kh, Kw = weight.shape[-2:]
    xp = _pad_same(x.astype(jnp.float32), Kh, Kw, sh, sw)
    y = jax.lax.conv_general_dilated(
        xp, weight.astype(jnp.float32), window_strides=(sh, sw), padding="VALID",
        dimension_numbers=("NCHW", "OIHW", "NCHW"),
        feature_group_count=groups, precision=jax.lax.Precision.HIGHEST)
    if bias is not None:
        y = y + bias.reshape(1, -1, 1, 1)
    return y


# ----------------------------- test --------------------------------------------

if __name__ == "__main__":
    key = jax.random.PRNGKey(0)
    ks = jax.random.split(key, 12)

    # Case 1: 3x3, stride 1, groups=1 -> direct (in-kernel im2col) MXU path.
    B, C_in, H, W, C_out, K = 2, 4, 16, 16, 8, 3
    x = jax.random.normal(ks[0], (B, C_in, H, W), jnp.float32)
    w = jax.random.normal(ks[1], (C_out, C_in, K, K), jnp.float32) * math.sqrt(2.0 / (C_in * K * K))
    b = 0.1 * jax.random.normal(ks[2], (C_out,), jnp.float32)
    ref = reference_forward(x, w, b, stride=1, groups=1)
    out = jax.block_until_ready(conv2d_dynamic_same_padding(
        x, w, b, stride=1, groups=1, compute_dtype=jnp.float32))
    assert out.shape == ref.shape == (B, C_out, H, W), out.shape
    err = float(jnp.max(jnp.abs(out - ref)))
    assert err < 5e-2, f"direct f32 path mismatch: {err}"

    out_bf = jax.block_until_ready(conv2d_dynamic_same_padding(
        x, w, b, stride=1, groups=1))                      # default bf16 MXU, f32 accumulate
    err_bf = float(jnp.max(jnp.abs(out_bf - ref)))
    assert err_bf < 1.5e-1, f"direct bf16 path mismatch: {err_bf}"

    # Case 2: even kernel, stride 2, odd spatial, groups=2 -> asymmetric pad, im2col path.
    x2 = jax.random.normal(ks[3], (2, 4, 15, 15), jnp.float32)
    w2 = jax.random.normal(ks[4], (8, 2, 4, 4), jnp.float32) * math.sqrt(2.0 / 32)
    b2 = 0.1 * jax.random.normal(ks[5], (8,), jnp.float32)
    ref2 = reference_forward(x2, w2, b2, stride=2, groups=2)
    out2 = jax.block_until_ready(conv2d_dynamic_same_padding(
        x2, w2, b2, stride=2, groups=2, compute_dtype=jnp.float32))
    assert out2.shape == ref2.shape, (out2.shape, ref2.shape)
    err2 = float(jnp.max(jnp.abs(out2 - ref2)))
    assert err2 < 5e-2, f"im2col (grouped / stride-2) path mismatch: {err2}"

    # Case 3: depthwise 3x3, stride 1 -> VPU tap-MAC path.
    x3 = jax.random.normal(ks[6], (2, 4, 15, 15), jnp.float32)
    w3 = jax.random.normal(ks[7], (4, 1, 3, 3), jnp.float32) * math.sqrt(2.0 / 9)
    b3 = 0.1 * jax.random.normal(ks[8], (4,), jnp.float32)
    ref3 = reference_forward(x3, w3, b3, stride=1, groups=4)
    out3 = jax.block_until_ready(conv2d_dynamic_same_padding(
        x3, w3, b3, stride=1, groups=4, compute_dtype=jnp.float32))
    assert out3.shape == ref3.shape, (out3.shape, ref3.shape)
    err3 = float(jnp.max(jnp.abs(out3 - ref3)))
    assert err3 < 1e-2, f"depthwise path mismatch: {err3}"

    # Case 4: 1x1 kernel, stride 2 -> negative "same" pad (crop), im2col path.
    x4 = jax.random.normal(ks[9], (1, 4, 16, 16), jnp.float32)
    w4 = jax.random.normal(ks[10], (8, 4, 1, 1), jnp.float32) * math.sqrt(2.0 / 4)
    b4 = 0.1 * jax.random.normal(ks[11], (8,), jnp.float32)
    ref4 = reference_forward(x4, w4, b4, stride=2, groups=1)
    out4 = jax.block_until_ready(conv2d_dynamic_same_padding(
        x4, w4, b4, stride=2, groups=1, compute_dtype=jnp.float32))
    assert out4.shape == ref4.shape, (out4.shape, ref4.shape)
    err4 = float(jnp.max(jnp.abs(out4 - ref4)))
    assert err4 < 5e-2, f"negative-pad 1x1 path mismatch: {err4}"

    print("KERNEL_OK")
</pallas_src>

<mosaic_0001>
module attributes {stable_mosaic.version = 11 : i64} {
  func.func @kernel(%arg0: i32, %arg1: i32, %arg2: i32, %arg3: memref<1x1x4x512xf32, #tpu.memory_space<vmem>>, %arg4: memref<1x9x8x4xf32, #tpu.memory_space<vmem>>, %arg5: memref<1x8x1xf32, #tpu.memory_space<vmem>>, %arg6: memref<1x1x8x384xf32, #tpu.memory_space<vmem>>, %arg7: memref<8x384xf32, #tpu.memory_space<vmem>>) attributes {dimension_semantics = [#tpu.dimension_semantics<parallel>, #tpu.dimension_semantics<parallel>, #tpu.dimension_semantics<parallel>], iteration_bounds = array<i64: 1, 2, 1>, scalar_prefetch = 0 : i64, scratch_operands = 1 : i64, tpu.core_type = #tpu.core_type<tc>, window_params = [{transform_indices = @transform_0, window_bounds = array<i64: 1, 1, 4, 512>}, {transform_indices = @transform_1, window_bounds = array<i64: 1, 9, 8, 4>}, {transform_indices = @transform_2, window_bounds = array<i64: 1, 8, 1>}, {transform_indices = @transform_3, window_bounds = array<i64: 1, 1, 8, 384>}]} {
    %c384_i32 = arith.constant 384 : i32
    %0 = arith.muli %arg2, %c384_i32 : i32
    %1 = tpu.assume_multiple %0, 128 : i32
    %c0 = arith.constant 0 : index
    %c0_0 = arith.constant 0 : index
    %c0_1 = arith.constant 0 : index
    %2 = arith.index_cast %1 : i32 to index
    %3 = vector.load %arg3[%c0, %c0_0, %c0_1, %2] : memref<1x1x4x512xf32, #tpu.memory_space<vmem>>, vector<1x1x4x512xf32>
    %4 = vector.shape_cast %3 : vector<1x1x4x512xf32> to vector<4x512xf32>
    %cst = arith.constant 0.000000e+00 : f32
    %5 = vector.broadcast %cst : f32 to vector<8x384xf32>
    %c0_2 = arith.constant 0 : index
    %c0_3 = arith.constant 0 : index
    %6 = vector.load %arg7[%c0_2, %c0_3] : memref<8x384xf32, #tpu.memory_space<vmem>>, vector<8x384xf32>
    tpu.vector_store %arg7[%c0_2, %c0_3], %5 {strides = array<i32>} : memref<8x384xf32, #tpu.memory_space<vmem>>, vector<8x384xf32>,
    %c0_4 = arith.constant 0 : index
    %c0_5 = arith.constant 0 : index
    %7 = vector.load %arg7[%c0_4, %c0_5] : memref<8x384xf32, #tpu.memory_space<vmem>>, vector<8x384xf32>
    %c0_6 = arith.constant 0 : index
    %c0_7 = arith.constant 0 : index
    %c0_8 = arith.constant 0 : index
    %c0_9 = arith.constant 0 : index
    %8 = vector.load %arg4[%c0_6, %c0_7, %c0_8, %c0_9] : memref<1x9x8x4xf32, #tpu.memory_space<vmem>>, vector<1x1x8x4xf32>
    %9 = vector.shape_cast %8 : vector<1x1x8x4xf32> to vector<8x4xf32>
    %10 = vector.extract_strided_slice %4 {offsets = [0, 0], sizes = [4, 384], strides = [1, 1]} : vector<4x512xf32> to vector<4x384xf32>
    %cst_10 = arith.constant dense<0.000000e+00> : vector<8x384xf32>
    %11 = tpu.matmul %9, %10, %cst_10 {dimension_numbers = #tpu.dot_dimension_numbers<[1], [0], [0], [1], [0, 0, 1, 1], [], []>} : vector<8x4xf32>, vector<4x384xf32>, vector<8x384xf32> -> vector<8x384xf32>
    %12 = arith.addf %7, %11 : vector<8x384xf32>
    %c0_11 = arith.constant 0 : index
    %c0_12 = arith.constant 0 : index
    %13 = vector.load %arg7[%c0_11, %c0_12] : memref<8x384xf32, #tpu.memory_space<vmem>>, vector<8x384xf32>
    tpu.vector_store %arg7[%c0_11, %c0_12], %12 {strides = array<i32>} : memref<8x384xf32, #tpu.memory_space<vmem>>, vector<8x384xf32>,
    %c0_13 = arith.constant 0 : index
    %c0_14 = arith.constant 0 : index
    %14 = vector.load %arg7[%c0_13, %c0_14] : memref<8x384xf32, #tpu.memory_space<vmem>>, vector<8x384xf32>
    %c0_15 = arith.constant 0 : index
    %c1 = arith.constant 1 : index
    %c0_16 = arith.constant 0 : index
    %c0_17 = arith.constant 0 : index
    %15 = vector.load %arg4[%c0_15, %c1, %c0_16, %c0_17] : memref<1x9x8x4xf32, #tpu.memory_space<vmem>>, vector<1x1x8x4xf32>
    %16 = vector.shape_cast %15 : vector<1x1x8x4xf32> to vector<8x4xf32>
    %17 = vector.extract_strided_slice %4 {offsets = [0, 1], sizes = [4, 384], strides = [1, 1]} : vector<4x512xf32> to vector<4x384xf32>
    %cst_18 = arith.constant dense<0.000000e+00> : vector<8x384xf32>
    %18 = tpu.matmul %16, %17, %cst_18 {dimension_numbers = #tpu.dot_dimension_numbers<[1], [0], [0], [1], [0, 0, 1, 1], [], []>} : vector<8x4xf32>, vector<4x384xf32>, vector<8x384xf32> -> vector<8x384xf32>
    %19 = arith.addf %14, %18 : vector<8x384xf32>
    %c0_19 = arith.constant 0 : index
    %c0_20 = arith.constant 0 : index
    %20 = vector.load %arg7[%c0_19, %c0_20] : memref<8x384xf32, #tpu.memory_space<vmem>>, vector<8x384xf32>
    tpu.vector_store %arg7[%c0_19, %c0_20], %19 {strides = array<i32>} : memref<8x384xf32, #tpu.memory_space<vmem>>, vector<8x384xf32>,
    %c0_21 = arith.constant 0 : index
    %c0_22 = arith.constant 0 : index
    %21 = vector.load %arg7[%c0_21, %c0_22] : memref<8x384xf32, #tpu.memory_space<vmem>>, vector<8x384xf32>
    %c0_23 = arith.constant 0 : index
    %c2 = arith.constant 2 : index
    %c0_24 = arith.constant 0 : index
    %c0_25 = arith.constant 0 : index
    %22 = vector.load %arg4[%c0_23, %c2, %c0_24, %c0_25] : memref<1x9x8x4xf32, #tpu.memory_space<vmem>>, vector<1x1x8x4xf32>
    %23 = vector.shape_cast %22 : vector<1x1x8x4xf32> to vector<8x4xf32>
    %24 = vector.extract_strided_slice %4 {offsets = [0, 2], sizes = [4, 384], strides = [1, 1]} : vector<4x512xf32> to vector<4x384xf32>
    %cst_26 = arith.constant dense<0.000000e+00> : vector<8x384xf32>
    %25 = tpu.matmul %23, %24, %cst_26 {dimension_numbers = #tpu.dot_dimension_numbers<[1], [0], [0], [1], [0, 0, 1, 1], [], []>} : vector<8x4xf32>, vector<4x384xf32>, vector<8x384xf32> -> vector<8x384xf32>
    %26 = arith.addf %21, %25 : vector<8x384xf32>
    %c0_27 = arith.constant 0 : index
    %c0_28 = arith.constant 0 : index
    %27 = vector.load %arg7[%c0_27, %c0_28] : memref<8x384xf32, #tpu.memory_space<vmem>>, vector<8x384xf32>
    tpu.vector_store %arg7[%c0_27, %c0_28], %26 {strides = array<i32>} : memref<8x384xf32, #tpu.memory_space<vmem>>, vector<8x384xf32>,
    %c0_29 = arith.constant 0 : index
    %c0_30 = arith.constant 0 : index
    %28 = vector.load %arg7[%c0_29, %c0_30] : memref<8x384xf32, #tpu.memory_space<vmem>>, vector<8x384xf32>
    %c0_31 = arith.constant 0 : index
    %c3 = arith.constant 3 : index
    %c0_32 = arith.constant 0 : index
    %c0_33 = arith.constant 0 : index
    %29 = vector.load %arg4[%c0_31, %c3, %c0_32, %c0_33] : memref<1x9x8x4xf32, #tpu.memory_space<vmem>>, vector<1x1x8x4xf32>
    %30 = vector.shape_cast %29 : vector<1x1x8x4xf32> to vector<8x4xf32>
    %31 = vector.extract_strided_slice %4 {offsets = [0, 18], sizes = [4, 384], strides = [1, 1]} : vector<4x512xf32> to vector<4x384xf32>
    %cst_34 = arith.constant dense<0.000000e+00> : vector<8x384xf32>
    %32 = tpu.matmul %30, %31, %cst_34 {dimension_numbers = #tpu.dot_dimension_numbers<[1], [0], [0], [1], [0, 0, 1, 1], [], []>} : vector<8x4xf32>, vector<4x384xf32>, vector<8x384xf32> -> vector<8x384xf32>
    %33 = arith.addf %28, %32 : vector<8x384xf32>
    %c0_35 = arith.constant 0 : index
    %c0_36 = arith.constant 0 : index
    %34 = vector.load %arg7[%c0_35, %c0_36] : memref<8x384xf32, #tpu.memory_space<vmem>>, vector<8x384xf32>
    tpu.vector_store %arg7[%c0_35, %c0_36], %33 {strides = array<i32>} : memref<8x384xf32, #tpu.memory_space<vmem>>, vector<8x384xf32>,
    %c0_37 = arith.constant 0 : index
    %c0_38 = arith.constant 0 : index
    %35 = vector.load %arg7[%c0_37, %c0_38] : memref<8x384xf32, #tpu.memory_space<vmem>>, vector<8x384xf32>
    %c0_39 = arith.constant 0 : index
    %c4 = arith.constant 4 : index
    %c0_40 = arith.constant 0 : index
    %c0_41 = arith.constant 0 : index
    %36 = vector.load %arg4[%c0_39, %c4, %c0_40, %c0_41] : memref<1x9x8x4xf32, #tpu.memory_space<vmem>>, vector<1x1x8x4xf32>
    %37 = vector.shape_cast %36 : vector<1x1x8x4xf32> to vector<8x4xf32>
    %38 = vector.extract_strided_slice %4 {offsets = [0, 19], sizes = [4, 384], strides = [1, 1]} : vector<4x512xf32> to vector<4x384xf32>
    %cst_42 = arith.constant dense<0.000000e+00> : vector<8x384xf32>
    %39 = tpu.matmul %37, %38, %cst_42 {dimension_numbers = #tpu.dot_dimension_numbers<[1], [0], [0], [1], [0, 0, 1, 1], [], []>} : vector<8x4xf32>, vector<4x384xf32>, vector<8x384xf32> -> vector<8x384xf32>
    %40 = arith.addf %35, %39 : vector<8x384xf32>
    %c0_43 = arith.constant 0 : index
    %c0_44 = arith.constant 0 : index
    %41 = vector.load %arg7[%c0_43, %c0_44] : memref<8x384xf32, #tpu.memory_space<vmem>>, vector<8x384xf32>
    tpu.vector_store %arg7[%c0_43, %c0_44], %40 {strides = array<i32>} : memref<8x384xf32, #tpu.memory_space<vmem>>, vector<8x384xf32>,
    %c0_45 = arith.constant 0 : index
    %c0_46 = arith.constant 0 : index
    %42 = vector.load %arg7[%c0_45, %c0_46] : memref<8x384xf32, #tpu.memory_space<vmem>>, vector<8x384xf32>
    %c0_47 = arith.constant 0 : index
    %c5 = arith.constant 5 : index
    %c0_48 = arith.constant 0 : index
    %c0_49 = arith.constant 0 : index
    %43 = vector.load %arg4[%c0_47, %c5, %c0_48, %c0_49] : memref<1x9x8x4xf32, #tpu.memory_space<vmem>>, vector<1x1x8x4xf32>
    %44 = vector.shape_cast %43 : vector<1x1x8x4xf32> to vector<8x4xf32>
    %45 = vector.extract_strided_slice %4 {offsets = [0, 20], sizes = [4, 384], strides = [1, 1]} : vector<4x512xf32> to vector<4x384xf32>
    %cst_50 = arith.constant dense<0.000000e+00> : vector<8x384xf32>
    %46 = tpu.matmul %44, %45, %cst_50 {dimension_numbers = #tpu.dot_dimension_numbers<[1], [0], [0], [1], [0, 0, 1, 1], [], []>} : vector<8x4xf32>, vector<4x384xf32>, vector<8x384xf32> -> vector<8x384xf32>
    %47 = arith.addf %42, %46 : vector<8x384xf32>
    %c0_51 = arith.constant 0 : index
    %c0_52 = arith.constant 0 : index
    %48 = vector.load %arg7[%c0_51, %c0_52] : memref<8x384xf32, #tpu.memory_space<vmem>>, vector<8x384xf32>
    tpu.vector_store %arg7[%c0_51, %c0_52], %47 {strides = array<i32>} : memref<8x384xf32, #tpu.memory_space<vmem>>, vector<8x384xf32>,
    %c0_53 = arith.constant 0 : index
    %c0_54 = arith.constant 0 : index
    %49 = vector.load %arg7[%c0_53, %c0_54] : memref<8x384xf32, #tpu.memory_space<vmem>>, vector<8x384xf32>
    %c0_55 = arith.constant 0 : index
    %c6 = arith.constant 6 : index
    %c0_56 = arith.constant 0 : index
    %c0_57 = arith.constant 0 : index
    %50 = vector.load %arg4[%c0_55, %c6, %c0_56, %c0_57] : memref<1x9x8x4xf32, #tpu.memory_space<vmem>>, vector<1x1x8x4xf32>
    %51 = vector.shape_cast %50 : vector<1x1x8x4xf32> to vector<8x4xf32>
    %52 = vector.extract_strided_slice %4 {offsets = [0, 36], sizes = [4, 384], strides = [1, 1]} : vector<4x512xf32> to vector<4x384xf32>
    %cst_58 = arith.constant dense<0.000000e+00> : vector<8x384xf32>
    %53 = tpu.matmul %51, %52, %cst_58 {dimension_numbers = #tpu.dot_dimension_numbers<[1], [0], [0], [1], [0, 0, 1, 1], [], []>} : vector<8x4xf32>, vector<4x384xf32>, vector<8x384xf32> -> vector<8x384xf32>
    %54 = arith.addf %49, %53 : vector<8x384xf32>
    %c0_59 = arith.constant 0 : index
    %c0_60 = arith.constant 0 : index
    %55 = vector.load %arg7[%c0_59, %c0_60] : memref<8x384xf32, #tpu.memory_space<vmem>>, vector<8x384xf32>
    tpu.vector_store %arg7[%c0_59, %c0_60], %54 {strides = array<i32>} : memref<8x384xf32, #tpu.memory_space<vmem>>, vector<8x384xf32>,
    %c0_61 = arith.constant 0 : index
    %c0_62 = arith.constant 0 : index
    %56 = vector.load %arg7[%c0_61, %c0_62] : memref<8x384xf32, #tpu.memory_space<vmem>>, vector<8x384xf32>
    %c0_63 = arith.constant 0 : index
    %c7 = arith.constant 7 : index
    %c0_64 = arith.constant 0 : index
    %c0_65 = arith.constant 0 : index
    %57 = vector.load %arg4[%c0_63, %c7, %c0_64, %c0_65] : memref<1x9x8x4xf32, #tpu.memory_space<vmem>>, vector<1x1x8x4xf32>
    %58 = vector.shape_cast %57 : vector<1x1x8x4xf32> to vector<8x4xf32>
    %59 = vector.extract_strided_slice %4 {offsets = [0, 37], sizes = [4, 384], strides = [1, 1]} : vector<4x512xf32> to vector<4x384xf32>
    %cst_66 = arith.constant dense<0.000000e+00> : vector<8x384xf32>
    %60 = tpu.matmul %58, %59, %cst_66 {dimension_numbers = #tpu.dot_dimension_numbers<[1], [0], [0], [1], [0, 0, 1, 1], [], []>} : vector<8x4xf32>, vector<4x384xf32>, vector<8x384xf32> -> vector<8x384xf32>
    %61 = arith.addf %56, %60 : vector<8x384xf32>
    %c0_67 = arith.constant 0 : index
    %c0_68 = arith.constant 0 : index
    %62 = vector.load %arg7[%c0_67, %c0_68] : memref<8x384xf32, #tpu.memory_space<vmem>>, vector<8x384xf32>
    tpu.vector_store %arg7[%c0_67, %c0_68], %61 {strides = array<i32>} : memref<8x384xf32, #tpu.memory_space<vmem>>, vector<8x384xf32>,
    %c0_69 = arith.constant 0 : index
    %c0_70 = arith.constant 0 : index
    %63 = vector.load %arg7[%c0_69, %c0_70] : memref<8x384xf32, #tpu.memory_space<vmem>>, vector<8x384xf32>
    %c0_71 = arith.constant 0 : index
    %c8 = arith.constant 8 : index
    %c0_72 = arith.constant 0 : index
    %c0_73 = arith.constant 0 : index
    %64 = vector.load %arg4[%c0_71, %c8, %c0_72, %c0_73] : memref<1x9x8x4xf32, #tpu.memory_space<vmem>>, vector<1x1x8x4xf32>
    %65 = vector.shape_cast %64 : vector<1x1x8x4xf32> to vector<8x4xf32>
    %66 = vector.extract_strided_slice %4 {offsets = [0, 38], sizes = [4, 384], strides = [1, 1]} : vector<4x512xf32> to vector<4x384xf32>
    %cst_74 = arith.constant dense<0.000000e+00> : vector<8x384xf32>
    %67 = tpu.matmul %65, %66, %cst_74 {dimension_numbers = #tpu.dot_dimension_numbers<[1], [0], [0], [1], [0, 0, 1, 1], [], []>} : vector<8x4xf32>, vector<4x384xf32>, vector<8x384xf32> -> vector<8x384xf32>
    %68 = arith.addf %63, %67 : vector<8x384xf32>
    %c0_75 = arith.constant 0 : index
    %c0_76 = arith.constant 0 : index
    %69 = vector.load %arg7[%c0_75, %c0_76] : memref<8x384xf32, #tpu.memory_space<vmem>>, vector<8x384xf32>
    tpu.vector_store %arg7[%c0_75, %c0_76], %68 {strides = array<i32>} : memref<8x384xf32, #tpu.memory_space<vmem>>, vector<8x384xf32>,
    %c0_77 = arith.constant 0 : index
    %c0_78 = arith.constant 0 : index
    %70 = vector.load %arg7[%c0_77, %c0_78] : memref<8x384xf32, #tpu.memory_space<vmem>>, vector<8x384xf32>
    %c0_79 = arith.constant 0 : index
    %c0_80 = arith.constant 0 : index
    %c0_81 = arith.constant 0 : index
    %71 = vector.load %arg5[%c0_79, %c0_80, %c0_81] : memref<1x8x1xf32, #tpu.memory_space<vmem>>, vector<1x8x1xf32>
    %72 = vector.shape_cast %71 : vector<1x8x1xf32> to vector<8x1xf32>
    %73 = vector.broadcast %72 : vector<8x1xf32> to vector<8x384xf32>
    %74 = arith.addf %70, %73 : vector<8x384xf32>
    %c0_82 = arith.constant 0 : index
    %c0_83 = arith.constant 0 : index
    %c0_84 = arith.constant 0 : index
    %c0_85 = arith.constant 0 : index
    %75 = vector.load %arg6[%c0_82, %c0_83, %c0_84, %c0_85] : memref<1x1x8x384xf32, #tpu.memory_space<vmem>>, vector<1x1x8x384xf32>
    %76 = vector.shape_cast %75 : vector<1x1x8x384xf32> to vector<8x384xf32>
    %77 = vector.shape_cast %74 : vector<8x384xf32> to vector<1x1x8x384xf32>
    tpu.vector_store %arg6[%c0_82, %c0_83, %c0_84, %c0_85], %77 {strides = array<i32>} : memref<1x1x8x384xf32, #tpu.memory_space<vmem>>, vector<1x1x8x384xf32>,
    return
  }
  func.func @transform_0(%arg0: i32, %arg1: i32, %arg2: i32) -> (i32, i32, i32, i32) {
    %c0_i32 = arith.constant 0 : i32
    %c0_i32_0 = arith.constant 0 : i32
    %c0_i32_1 = arith.constant 0 : i32
    return %arg1, %arg0, %c0_i32, %c0_i32_0 : i32, i32, i32, i32
  }
  func.func @transform_1(%arg0: i32, %arg1: i32, %arg2: i32) -> (i32, i32, i32, i32) {
    %c0_i32 = arith.constant 0 : i32
    %c0_i32_0 = arith.constant 0 : i32
    %c0_i32_1 = arith.constant 0 : i32
    %c0_i32_2 = arith.constant 0 : i32
    return %arg0, %c0_i32, %c0_i32_0, %c0_i32_1 : i32, i32, i32, i32
  }
  func.func @transform_2(%arg0: i32, %arg1: i32, %arg2: i32) -> (i32, i32, i32) {
    %c0_i32 = arith.constant 0 : i32
    %c0_i32_0 = arith.constant 0 : i32
    %c0_i32_1 = arith.constant 0 : i32
    return %arg0, %c0_i32, %c0_i32_0 : i32, i32, i32
  }
  func.func @transform_3(%arg0: i32, %arg1: i32, %arg2: i32) -> (i32, i32, i32, i32) {
    %c0_i32 = arith.constant 0 : i32
    %c0_i32_0 = arith.constant 0 : i32
    return %arg1, %arg0, %c0_i32, %arg2 : i32, i32, i32, i32
  }
}

</mosaic_0001>

<llo_original>
// kernel: _forward.1
$region0: #{_forward.1}
  #allocation0 [shape = 'u32[]', space=smem, size = 0x4, offset = 0x4, fixed_abs, tag = 'smem constant byte address 0x4 - core index']
  #allocation1 [shape = 'u32[144,128]{1,0:T(1,128)}', space=vmem, size = 0x12000, scoped, tag = 'internal scratch']
  #allocation2 [shape = 'f32[8,384]{1,0:T(8,128)}', space=vmem, size = 0x3000, scoped, tag = 'scratch operand']
  %s0 = inlined_call_operand.vmem [shape: f32[2,1,4,512], index: 0, kind: input, shape index: {}]
  %s1 = inlined_call_operand.vmem [shape: f32[1,9,8,4], index: 1, kind: input, shape index: {}]
  %s2 = inlined_call_operand.vmem [shape: f32[1,8,1], index: 2, kind: input, shape index: {}]
  %s3 = inlined_call_operand.vmem [shape: f32[2,1,8,384], index: 3, kind: output, shape index: {}]
  %s4 = sld [smem:[#allocation0]]
  $region45: #{_forward.1} parent=0
    _
  %s6 = ssub.s32 1, %s4
  %s7 = scalar_select 0, %s6, %s4
  loop: start=0, step=1, limit=4
  $region2: #{_forward.1} parent=0 // loop_pre_header
    _
  $region3: #{_forward.1} parent=0 // loop_header
    %s9 = sphi 0, %s13
    %p10 = scmp.ge.s32.totalorder %s9, 4
    %s16 = sphi 0, %s35
    %s17 = sphi 0, %s31
    %s18 = sphi 0, %s27
    %s19 = sphi 0, %s16
    %s20 = sphi 0, %s17
    %s21 = sphi 0, %s18
    %s22 = sphi 0, %s19
    %s23 = sphi 0, %s20
    %s24 = sphi 0, %s21
    %s40 = sphi 0, %s42
    %s43 = sphi 0, %s40
    %s44 = sphi 0, %s43
    %s60 = sphi 0, %s44
    %s66 = sphi 0, %s68
    %s69 = sphi 0, %s66
    %s70 = sphi 0, %s69
    %s86 = sphi 0, %s70
    %s92 = sphi 0, %s94
    %s95 = sphi 0, %s92
    %s96 = sphi 0, %s95
    %s112 = sphi 0, %s96
    %s122 = sphi 0, %s124
    %s125 = sphi 0, %s122
    %s126 = sphi 0, %s125
    %s142 = sphi 0, %s126
  $region4: #{_forward.1} parent=0 // loop_header_branch
    %12 = sbr.rel (%p10) target = $region8
  $region5: #{_forward.1} parent=0 // loop_body
    %s14 = ssub.s32 %s9, 1
    %s15 = ssub.s32 %s9, 2
    %s25 = sadd.s32 1, %s18
    %p26 = scmp.ge.s32.totalorder %s25, 1
    %s27 = scalar_select %p26, 0, %s25
    %s28 = sadd.s32 1, %s17
    %s29 = scalar_select %p26, %s28, %s17
    %p30 = scmp.ge.s32.totalorder %s29, 2
    %s31 = scalar_select %p30, 0, %s29
    %s32 = sadd.s32 1, %s16
    %s33 = scalar_select %p30, %s32, %s16
    %p34 = scmp.ge.s32.totalorder %s33, 1
    %s35 = scalar_select %p34, 0, %s33
    %s36 = ssub.s32 %s17, %s31
    %s37 = ssub.s32 %s16, %s35
    %s38 = sor.u32 %s36, %s37
    %p39 = scmp.eq.s32.totalorder %s38, 0
    %s41 = sadd.s32 %s40, 1
    %s42 = scalar_select %p39, %s40, %s41
    %p45 = pneg %p39
    %p46 = scmp.eq.s32.totalorder %s9, 1
    %p47 = por %p45, %p46
    %p48 = scmp.ne.s32.totalorder %s40, %s43
    %p49 = scmp.eq.s32.totalorder %s9, 0
    %p50 = por %p48, %p49
    %p51 = scmp.ne.s32.totalorder %s40, %s43
    %p52 = scmp.eq.s32.totalorder %s14, 1
    %p53 = por %p51, %p52
    %p54 = scmp.ne.s32.totalorder %s43, %s44
    %p55 = scmp.eq.s32.totalorder %s14, 0
    %p56 = por %p54, %p55
    %p57 = scmp.ne.s32.totalorder %s43, %s44
    %p58 = scmp.eq.s32.totalorder %s15, 1
    %p59 = por %p57, %p58
    %p61 = scmp.ne.s32.totalorder %s44, %s60
    %p62 = scmp.eq.s32.totalorder %s15, 0
    %p63 = por %p61, %p62
    %s64 = ssub.s32 %s16, %s35
    %p65 = scmp.eq.s32.totalorder %s64, 0
    %s67 = sadd.s32 %s66, 1
    %s68 = scalar_select %p65, %s66, %s67
    %p71 = pneg %p65
    %p72 = scmp.eq.s32.totalorder %s9, 1
    %p73 = por %p71, %p72
    %p74 = scmp.ne.s32.totalorder %s66, %s69
    %p75 = scmp.eq.s32.totalorder %s9, 0
    %p76 = por %p74, %p75
    %p77 = scmp.ne.s32.totalorder %s66, %s69
    %p78 = scmp.eq.s32.totalorder %s14, 1
    %p79 = por %p77, %p78
    %p80 = scmp.ne.s32.totalorder %s69, %s70
    %p81 = scmp.eq.s32.totalorder %s14, 0
    %p82 = por %p80, %p81
    %p83 = scmp.ne.s32.totalorder %s69, %s70
    %p84 = scmp.eq.s32.totalorder %s15, 1
    %p85 = por %p83, %p84
    %p87 = scmp.ne.s32.totalorder %s70, %s86
    %p88 = scmp.eq.s32.totalorder %s15, 0
    %p89 = por %p87, %p88
    %s90 = ssub.s32 %s16, %s35
    %p91 = scmp.eq.s32.totalorder %s90, 0
    %s93 = sadd.s32 %s92, 1
    %s94 = scalar_select %p91, %s92, %s93
    %p97 = pneg %p91
    %p98 = scmp.eq.s32.totalorder %s9, 1
    %p99 = por %p97, %p98
    %p100 = scmp.ne.s32.totalorder %s92, %s95
    %p101 = scmp.eq.s32.totalorder %s9, 0
    %p102 = por %p100, %p101
    %p103 = scmp.ne.s32.totalorder %s92, %s95
    %p104 = scmp.eq.s32.totalorder %s14, 1
    %p105 = por %p103, %p104
    %p106 = scmp.ne.s32.totalorder %s95, %s96
    %p107 = scmp.eq.s32.totalorder %s14, 0
    %p108 = por %p106, %p107
    %p109 = scmp.ne.s32.totalorder %s95, %s96
    %p110 = scmp.eq.s32.totalorder %s15, 1
    %p111 = por %p109, %p110
    %p113 = scmp.ne.s32.totalorder %s96, %s112
    %p114 = scmp.eq.s32.totalorder %s15, 0
    %p115 = por %p113, %p114
    %s116 = ssub.s32 %s17, %s31
    %s117 = ssub.s32 %s16, %s35
    %s118 = sor.u32 %s116, %s117
    %s119 = ssub.s32 %s18, %s27
    %s120 = sor.u32 %s118, %s119
    %p121 = scmp.eq.s32.totalorder %s120, 0
    %s123 = sadd.s32 %s122, 1
    %s124 = scalar_select %p121, %s122, %s123
    %p127 = pneg %p121
    %p128 = scmp.eq.s32.totalorder %s9, 1
    %p129 = por %p127, %p128
    %p130 = scmp.ne.s32.totalorder %s122, %s125
    %p131 = scmp.eq.s32.totalorder %s9, 0
    %p132 = por %p130, %p131
    %p133 = scmp.ne.s32.totalorder %s122, %s125
    %p134 = scmp.eq.s32.totalorder %s14, 1
    %p135 = por %p133, %p134
    %p136 = scmp.ne.s32.totalorder %s125, %s126
    %p137 = scmp.eq.s32.totalorder %s14, 0
    %p138 = por %p136, %p137
    %p139 = scmp.ne.s32.totalorder %s125, %s126
    %p140 = scmp.eq.s32.totalorder %s15, 1
    %p141 = por %p139, %p140
    %p143 = scmp.ne.s32.totalorder %s126, %s142
    %p144 = scmp.eq.s32.totalorder %s15, 0
    %p145 = por %p143, %p144
    %p146 = scmp.le.s32.totalorder 1, %s9
    %p147 = scmp.lt.s32.totalorder %s9, 3
    %p148 = pnand %p146, %p147
    %p149 = pneg %p148
    // Predicated region
    $region9: #{_forward.1} parent=5 // pred_check
      _
    $region10: #{_forward.1} parent=5 // pred_check_branch
      %151 = sbr.rel (%p148) target = $region12
    $region11: #{_forward.1} parent=5 // pred_region
      %s152 = ssub.s32 %s9, 1
      // Predicated region
      $region13: #{_forward.1} parent=11 // pred_check
        %p153 = pneg %p82
      $region14: #{_forward.1} parent=11 // pred_check_branch
        %155 = sbr.rel (%p153) target = $region16
      $region15: #{_forward.1} parent=11 // pred_region
        %p156 = scmp.lt.s32.totalorder %s19, 0
        %s157 = scalar_select %p156, %s19, 0
        %s158 = smul.addr %s157, 9
        %s159 = smul.addr %s158, 8
        %s160 = scalar_lea.vmem %s1, %s159
      $region16: #{_forward.1} parent=11 // pred_fallthru
        _
      // Predicated region
      $region17: #{_forward.1} parent=11 // pred_check
        %p161 = pneg %p108
      $region18: #{_forward.1} parent=11 // pred_check_branch
        %163 = sbr.rel (%p161) target = $region20
      $region19: #{_forward.1} parent=11 // pred_region
        %p164 = scmp.lt.s32.totalorder %s19, 0
        %s165 = scalar_select %p164, %s19, 0
        %s166 = smul.addr %s165, 8
        %s167 = scalar_lea.vmem %s2, %s166
      $region20: #{_forward.1} parent=11 // pred_fallthru
        _
    $region12: #{_forward.1} parent=5 // pred_fallthru
      _
    %p168 = scmp.lt.s32.totalorder %s9, 2
    // Predicated region
    $region21: #{_forward.1} parent=5 // pred_check
      %p169 = pneg %p168
    $region22: #{_forward.1} parent=5 // pred_check_branch
      %171 = sbr.rel (%p169) target = $region24
    $region23: #{_forward.1} parent=5 // pred_region
      // Predicated region
      $region25: #{_forward.1} parent=23 // pred_check
        %p172 = pneg %p50
      $region26: #{_forward.1} parent=23 // pred_check_branch
        %174 = sbr.rel (%p172) target = $region28
      $region27: #{_forward.1} parent=23 // pred_region
        %p175 = scmp.lt.s32.totalorder %s17, 1
        %s176 = scalar_select %p175, %s17, 1
        %p177 = scmp.lt.s32.totalorder %s16, 0
        %s178 = scalar_select %p177, %s16, 0
        %s179 = smul.addr %s178, 4
        %s180 = smul.addr %s176, 4
        %s181 = sadd.s32 %s179, %s180
        %s182 = smul.addr %s181, 4
        %s183 = scalar_lea.vmem %s0, %s182
      $region28: #{_forward.1} parent=23 // pred_fallthru
        _
    $region24: #{_forward.1} parent=5 // pred_fallthru
      _
    %p184 = scmp.le.s32.totalorder 1, %s9
    %p185 = scmp.lt.s32.totalorder %s9, 3
    %p186 = pnand %p184, %p185
    %p187 = pneg %p186
    // Predicated region
    $region29: #{_forward.1} parent=5 // pred_check
      _
    $region30: #{_forward.1} parent=5 // pred_check_branch
      %189 = sbr.rel (%p186) target = $region32
    $region31: #{_forward.1} parent=5 // pred_region
      %s190 = ssub.s32 %s9, 1
      %p191 = scmp.lt.s32.totalorder %s20, 1
      %s192 = scalar_select %p191, %s20, 1
      %p193 = scmp.lt.s32.totalorder %s19, 0
      %s194 = scalar_select %p193, %s19, 0
      %s195 = smul.addr %s194, 4
      %s196 = smul.addr %s192, 4
      %s197 = sadd.s32 %s195, %s196
      %s198 = smul.addr %s197, 4
      %s199 = scalar_lea.vmem %s0, %s198
      %p200 = pneg %p56
      %p201 = pneg %p53
      %p202 = scmp.lt.s32.totalorder %s19, 0
      %s203 = scalar_select %p202, %s19, 0
      %s204 = smul.addr %s203, 9
      %s205 = smul.addr %s204, 8
      %s206 = scalar_lea.vmem %s1, %s205
      %p207 = pneg %p82
      %p208 = pneg %p79
      %p209 = scmp.lt.s32.totalorder %s19, 0
      %s210 = scalar_select %p209, %s19, 0
      %s211 = smul.addr %s210, 8
      %s212 = scalar_lea.vmem %s2, %s211
      %p213 = pneg %p108
      %p214 = pneg %p105
      %p215 = pneg %p138
      %p216 = pneg %p135
      %s217 = smul.u32 3, %s21
      %p218 = scmp.lt.s32.totalorder %s20, 1
      %s219 = scalar_select %p218, %s20, 1
      %p220 = scmp.lt.s32.totalorder %s19, 0
      %s221 = scalar_select %p220, %s19, 0
      %p222 = scmp.lt.s32.totalorder %s217, 2
      %s223 = scalar_select %p222, %s217, 2
      %s224 = smul.addr %s221, 3
      %s225 = sadd.s32 %s223, %s224
      %s226 = smul.addr %s219, 3
      %s227 = sadd.s32 %s225, %s226
      %s228 = smul.addr %s227, 8
      %s229 = scalar_lea.vmem %s3, %s228
      %p230 = scmp.lt.s32.totalorder %s20, 1
      %s231 = scalar_select %p230, %s20, 1
      %p232 = scmp.lt.s32.totalorder %s19, 0
      %s233 = scalar_select %p232, %s19, 0
      %s234 = smul.addr %s233, 4
      %s235 = smul.addr %s231, 4
      %s236 = sadd.s32 %s234, %s235
      %s237 = smul.addr %s236, 4
      %s238 = scalar_lea.vmem %s0, %s237
      %p239 = scmp.lt.s32.totalorder %s19, 0
      %s240 = scalar_select %p239, %s19, 0
      %s241 = smul.addr %s240, 9
      %s242 = smul.addr %s241, 8
      %s243 = scalar_lea.vmem %s1, %s242
      %p244 = scmp.lt.s32.totalorder %s19, 0
      %s245 = scalar_select %p244, %s19, 0
      %s246 = smul.addr %s245, 8
      %s247 = scalar_lea.vmem %s2, %s246
      %s248 = smul.u32 3, %s21
      %p249 = scmp.lt.s32.totalorder %s20, 1
      %s250 = scalar_select %p249, %s20, 1
      %p251 = scmp.lt.s32.totalorder %s19, 0
      %s252 = scalar_select %p251, %s19, 0
      %p253 = scmp.lt.s32.totalorder %s248, 2
      %s254 = scalar_select %p253, %s248, 2
      %s255 = smul.addr %s252, 3
      %s256 = sadd.s32 %s254, %s255
      %s257 = smul.addr %s250, 3
      %s258 = sadd.s32 %s256, %s257
      %s259 = smul.addr %s258, 8
      %s260 = scalar_lea.vmem %s3, %s259
      %s261 = smul.u32 3, %s21
      %s262 = smul.u32 %s21, 384
      %s263 = sshra.s32 %s262, 7
      %s264 = sand.u32 %s262, 127
      %s265 = smul.addr %s263, 4
      %s266 = scalar_lea.vmem %s238, %s265
      %v267 = vld [vmem:[%s266] sm:$0xff]
      %v268 = vld [vmem:[%s266 + $0x8] sm:$0xff]
      %269 = vst [vmem:[#allocation2] sm:$0xff] 0.0
      %270 = vst [vmem:[#allocation2 + $0x8] sm:$0xff] 0.0
      %271 = vst [vmem:[#allocation2 + $0x10] sm:$0xff] 0.0
      %v272 = vld [vmem:[#allocation2] sm:$0xff]
      %v273 = vld [vmem:[#allocation2 + $0x8] sm:$0xff]
      %v274 = vld [vmem:[#allocation2 + $0x10] sm:$0xff]
      %v275 = vld [vmem:[%s243] sm:$0xff]
      %v278 = vcombine.high %v267, %v267
      %vm279 = vcmask 31744
      %v281 = vsel %vm279, %v275, 0
      %vm283 = vcmask 1043456
      %v284 = vsel %vm283, %v267, 0
      %v286 = vsel %vm283, %v278, 0
      %v288 = vsel %vm283, %v268, 0
      %290 = vmatprep.subr.mxu0 0.0
      %291 = vmatpush1.msra.mxu0 0.0
      %292 = vmatprep.subr.mxu0 0.0
      %293 = vmatpush1.msra.mxu0 0.0
      %294 = vmatprep.subr.mxu0 0.0
      %295 = vmatpush1.msra.mxu0 0.0
      %296 = vmatprep.subr.mxu0 0.0
      %297 = vmatpush1.msra.mxu0 0.0
      %298 = vmatprep.subr.mxu0 0.0
      %299 = vmatpush1.msra.mxu0 0.0
      %300 = vmatprep.subr.mxu0 0.0
      %301 = vmatpush1.msra.mxu0 0.0
      %302 = vmatprep.subr.mxu0 0.0
      %303 = vmatpush1.msra.mxu0 0.0
      %304 = vmatprep.subr.mxu0 0.0
      %305 = vmatpush1.msra.mxu0 0.0
      %306 = vmatprep.subr.mxu0 0.0
      %307 = vmatpush1.msra.mxu0 0.0
      %308 = vmatprep.subr.mxu0 0.0
      %309 = vmatpush1.msra.mxu0 0.0
      %310 = vmatprep.subr.mxu0 0.0
      %311 = vmatpush1.msra.mxu0 0.0
      %312 = vmatprep.subr.mxu0 0.0
      %313 = vmatpush1.msra.mxu0 0.0
      %314 = vmatprep.subr.mxu0 0.0
      %315 = vmatpush1.msra.mxu0 0.0
      %316 = vmatprep.subr.mxu0 0.0
      %317 = vmatpush1.msra.mxu0 0.0
      %318 = vmatprep.subr.mxu0 0.0
      %319 = vmatpush1.msra.mxu0 0.0
      %320 = vmatprep.subr.mxu0 %v286
      %321 = vmatpush1.msra.mxu0 %v284
      %322 = vmatprep.subr.mxu0 0.0
      %323 = vmatpush2.msra.mxu0 0.0
      %324 = vmatprep.subr.mxu0 0.0
      %325 = vmatpush2.msra.mxu0 0.0
      %326 = vmatprep.subr.mxu0 0.0
      %327 = vmatpush2.msra.mxu0 0.0
      %328 = vmatprep.subr.mxu0 0.0
      %329 = vmatpush2.msra.mxu0 0.0
      %330 = vmatprep.subr.mxu0 0.0
      %331 = vmatpush2.msra.mxu0 0.0
      %332 = vmatprep.subr.mxu0 0.0
      %333 = vmatpush2.msra.mxu0 0.0
      %334 = vmatprep.subr.mxu0 0.0
      %335 = vmatpush2.msra.mxu0 0.0
      %336 = vmatprep.subr.mxu0 0.0
      %337 = vmatpush2.msra.mxu0 0.0
      %338 = vmatprep.subr.mxu0 0.0
      %339 = vmatpush2.msra.mxu0 0.0
      %340 = vmatprep.subr.mxu0 0.0
      %341 = vmatpush2.msra.mxu0 0.0
      %342 = vmatprep.subr.mxu0 0.0
      %343 = vmatpush2.msra.mxu0 0.0
      %344 = vmatprep.subr.mxu0 0.0
      %345 = vmatpush2.msra.mxu0 0.0
      %346 = vmatprep.subr.mxu0 0.0
      %347 = vmatpush2.msra.mxu0 0.0
      %348 = vmatprep.subr.mxu0 0.0
      %349 = vmatpush2.msra.mxu0 0.0
      %350 = vmatprep.subr.mxu0 0.0
      %351 = vmatpush2.msra.mxu0 0.0
      %352 = vmatprep.subr.mxu0 0.0
      %353 = vmatpush2.msra.mxu0 0.0
      %354 = vmatprep.mubr.f32.mxu0 0.0
      %355 = vmatmul.mubr.f32.gmra.mxu0 %v281
      %v356 = vpop.f32.mrf.mxu0
      %v357 = vadd.f32 0.0, %v356
      %v358 = vpop.f32.mrf.mxu0
      %v359 = vadd.f32 0.0, %v358
      %360 = vdwg.mxu0
      %361 = vmatprep.subr.mxu0 0.0
      %362 = vmatpush1.msra.mxu0 0.0
      %363 = vmatprep.subr.mxu0 0.0
      %364 = vmatpush1.msra.mxu0 0.0
      %365 = vmatprep.subr.mxu0 0.0
      %366 = vmatpush1.msra.mxu0 0.0
      %367 = vmatprep.subr.mxu0 0.0
      %368 = vmatpush1.msra.mxu0 0.0
      %369 = vmatprep.subr.mxu0 0.0
      %370 = vmatpush1.msra.mxu0 0.0
      %371 = vmatprep.subr.mxu0 0.0
      %372 = vmatpush1.msra.mxu0 0.0
      %373 = vmatprep.subr.mxu0 0.0
      %374 = vmatpush1.msra.mxu0 0.0
      %375 = vmatprep.subr.mxu0 0.0
      %376 = vmatpush1.msra.mxu0 0.0
      %377 = vmatprep.subr.mxu0 0.0
      %378 = vmatpush1.msra.mxu0 0.0
      %379 = vmatprep.subr.mxu0 0.0
      %380 = vmatpush1.msra.mxu0 0.0
      %381 = vmatprep.subr.mxu0 0.0
      %382 = vmatpush1.msra.mxu0 0.0
      %383 = vmatprep.subr.mxu0 0.0
      %384 = vmatpush1.msra.mxu0 0.0
      %385 = vmatprep.subr.mxu0 0.0
      %386 = vmatpush1.msra.mxu0 0.0
      %387 = vmatprep.subr.mxu0 0.0
      %388 = vmatpush1.msra.mxu0 0.0
      %389 = vmatprep.subr.mxu0 0.0
      %390 = vmatpush1.msra.mxu0 0.0
      %391 = vmatprep.subr.mxu0 0.0
      %392 = vmatpush1.msra.mxu0 %v288
      %393 = vmatprep.subr.mxu0 0.0
      %394 = vmatpush2.msra.mxu0 0.0
      %395 = vmatprep.subr.mxu0 0.0
      %396 = vmatpush2.msra.mxu0 0.0
      %397 = vmatprep.subr.mxu0 0.0
      %398 = vmatpush2.msra.mxu0 0.0
      %399 = vmatprep.subr.mxu0 0.0
      %400 = vmatpush2.msra.mxu0 0.0
      %401 = vmatprep.subr.mxu0 0.0
      %402 = vmatpush2.msra.mxu0 0.0
      %403 = vmatprep.subr.mxu0 0.0
      %404 = vmatpush2.msra.mxu0 0.0
      %405 = vmatprep.subr.mxu0 0.0
      %406 = vmatpush2.msra.mxu0 0.0
      %407 = vmatprep.subr.mxu0 0.0
      %408 = vmatpush2.msra.mxu0 0.0
      %409 = vmatprep.subr.mxu0 0.0
      %410 = vmatpush2.msra.mxu0 0.0
      %411 = vmatprep.subr.mxu0 0.0
      %412 = vmatpush2.msra.mxu0 0.0
      %413 = vmatprep.subr.mxu0 0.0
      %414 = vmatpush2.msra.mxu0 0.0
      %415 = vmatprep.subr.mxu0 0.0
      %416 = vmatpush2.msra.mxu0 0.0
      %417 = vmatprep.subr.mxu0 0.0
      %418 = vmatpush2.msra.mxu0 0.0
      %419 = vmatprep.subr.mxu0 0.0
      %420 = vmatpush2.msra.mxu0 0.0
      %421 = vmatprep.subr.mxu0 0.0
      %422 = vmatpush2.msra.mxu0 0.0
      %423 = vmatprep.subr.mxu0 0.0
      %424 = vmatpush2.msra.mxu0 0.0
      %425 = vmatprep.mubr.f32.mxu0 0.0
      %426 = vmatmul.mubr.f32.gmra.mxu0 %v281
      %v427 = vpop.f32.mrf.mxu0
      %v428 = vadd.f32 0.0, %v427
      %v429 = vpop.f32.mrf.mxu0
      %430 = vdwg.mxu0
      %v431 = vadd.f32 %v272, %v357
      %v432 = vadd.f32 %v273, %v359
      %v433 = vadd.f32 %v274, %v428
      %434 = vst [vmem:[#allocation2] sm:$0xff] %v431
      %435 = vst [vmem:[#allocation2 + $0x8] sm:$0xff] %v432
      %436 = vst [vmem:[#allocation2 + $0x10] sm:$0xff] %v433
      %v437 = vld [vmem:[#allocation2] sm:$0xff]
      %v438 = vld [vmem:[#allocation2 + $0x8] sm:$0xff]
      %v439 = vld [vmem:[#allocation2 + $0x10] sm:$0xff]
      %s440 = scalar_lea.vmem %s243, 8
      %v441 = vld [vmem:[%s440] sm:$0xff]
      %v442 = vcombine.high %v268, %v268
      %443 = vrot.lane.b32.xlu0 %v267, 127
      %v444 = vpop.permute.xlu0 %443
      %445 = vrot.lane.b32.xlu0 %v278, 127
      %v446 = vpop.permute.xlu0 %445
      %447 = vrot.lane.b32.xlu0 %v268, 127
      %v448 = vpop.permute.xlu0 %447
      %449 = vrot.lane.b32.xlu0 %v442, 127
      %v450 = vpop.permute.xlu0 %449
      %vm451 = vcmask 1039360
      %v452 = vsel %vm451, %v444, %v446
      %v453 = vsel %vm451, %v446, %v448
      %v454 = vsel %vm451, %v448, %v450
      %v456 = vsel %vm279, %v441, 0
      %v458 = vsel %vm283, %v452, 0
      %v460 = vsel %vm283, %v453, 0
      %v462 = vsel %vm283, %v454, 0
      %464 = vmatprep.subr.mxu0 0.0
      %465 = vmatpush1.msra.mxu0 0.0
      %466 = vmatprep.subr.mxu0 0.0
      %467 = vmatpush1.msra.mxu0 0.0
      %468 = vmatprep.subr.mxu0 0.0
      %469 = vmatpush1.msra.mxu0 0.0
      %470 = vmatprep.subr.mxu0 0.0
      %471 = vmatpush1.msra.mxu0 0.0
      %472 = vmatprep.subr.mxu0 0.0
      %473 = vmatpush1.msra.mxu0 0.0
      %474 = vmatprep.subr.mxu0 0.0
      %475 = vmatpush1.msra.mxu0 0.0
      %476 = vmatprep.subr.mxu0 0.0
      %477 = vmatpush1.msra.mxu0 0.0
      %478 = vmatprep.subr.mxu0 0.0
      %479 = vmatpush1.msra.mxu0 0.0
      %480 = vmatprep.subr.mxu0 0.0
      %481 = vmatpush1.msra.mxu0 0.0
      %482 = vmatprep.subr.mxu0 0.0
      %483 = vmatpush1.msra.mxu0 0.0
      %484 = vmatprep.subr.mxu0 0.0
      %485 = vmatpush1.msra.mxu0 0.0
      %486 = vmatprep.subr.mxu0 0.0
      %487 = vmatpush1.msra.mxu0 0.0
      %488 = vmatprep.subr.mxu0 0.0
      %489 = vmatpush1.msra.mxu0 0.0
      %490 = vmatprep.subr.mxu0 0.0
      %491 = vmatpush1.msra.mxu0 0.0
      %492 = vmatprep.subr.mxu0 0.0
      %493 = vmatpush1.msra.mxu0 0.0
      %494 = vmatprep.subr.mxu0 %v460
      %495 = vmatpush1.msra.mxu0 %v458
      %496 = vmatprep.subr.mxu0 0.0
      %497 = vmatpush2.msra.mxu0 0.0
      %498 = vmatprep.subr.mxu0 0.0
      %499 = vmatpush2.msra.mxu0 0.0
      %500 = vmatprep.subr.mxu0 0.0
      %501 = vmatpush2.msra.mxu0 0.0
      %502 = vmatprep.subr.mxu0 0.0
      %503 = vmatpush2.msra.mxu0 0.0
      %504 = vmatprep.subr.mxu0 0.0
      %505 = vmatpush2.msra.mxu0 0.0
      %506 = vmatprep.subr.mxu0 0.0
      %507 = vmatpush2.msra.mxu0 0.0
      %508 = vmatprep.subr.mxu0 0.0
      %509 = vmatpush2.msra.mxu0 0.0
      %510 = vmatprep.subr.mxu0 0.0
      %511 = vmatpush2.msra.mxu0 0.0
      %512 = vmatprep.subr.mxu0 0.0
      %513 = vmatpush2.msra.mxu0 0.0
      %514 = vmatprep.subr.mxu0 0.0
      %515 = vmatpush2.msra.mxu0 0.0
      %516 = vmatprep.subr.mxu0 0.0
      %517 = vmatpush2.msra.mxu0 0.0
      %518 = vmatprep.subr.mxu0 0.0
      %519 = vmatpush2.msra.mxu0 0.0
      %520 = vmatprep.subr.mxu0 0.0
      %521 = vmatpush2.msra.mxu0 0.0
      %522 = vmatprep.subr.mxu0 0.0
      %523 = vmatpush2.msra.mxu0 0.0
      %524 = vmatprep.subr.mxu0 0.0
      %525 = vmatpush2.msra.mxu0 0.0
      %526 = vmatprep.subr.mxu0 0.0
      %527 = vmatpush2.msra.mxu0 0.0
      %528 = vmatprep.mubr.f32.mxu0 0.0
      %529 = vmatmul.mubr.f32.gmra.mxu0 %v456
      %v530 = vpop.f32.mrf.mxu0
      %v531 = vadd.f32 0.0, %v530
      %v532 = vpop.f32.mrf.mxu0
      %v533 = vadd.f32 0.0, %v532
      %534 = vdwg.mxu0
      %535 = vmatprep.subr.mxu0 0.0
      %536 = vmatpush1.msra.mxu0 0.0
      %537 = vmatprep.subr.mxu0 0.0
      %538 = vmatpush1.msra.mxu0 0.0
      %539 = vmatprep.subr.mxu0 0.0
      %540 = vmatpush1.msra.mxu0 0.0
      %541 = vmatprep.subr.mxu0 0.0
      %542 = vmatpush1.msra.mxu0 0.0
      %543 = vmatprep.subr.mxu0 0.0
      %544 = vmatpush1.msra.mxu0 0.0
      %545 = vmatprep.subr.mxu0 0.0
      %546 = vmatpush1.msra.mxu0 0.0
      %547 = vmatprep.subr.mxu0 0.0
      %548 = vmatpush1.msra.mxu0 0.0
      %549 = vmatprep.subr.mxu0 0.0
      %550 = vmatpush1.msra.mxu0 0.0
      %551 = vmatprep.subr.mxu0 0.0
      %552 = vmatpush1.msra.mxu0 0.0
      %553 = vmatprep.subr.mxu0 0.0
      %554 = vmatpush1.msra.mxu0 0.0
      %555 = vmatprep.subr.mxu0 0.0
      %556 = vmatpush1.msra.mxu0 0.0
      %557 = vmatprep.subr.mxu0 0.0
      %558 = vmatpush1.msra.mxu0 0.0
      %559 = vmatprep.subr.mxu0 0.0
      %560 = vmatpush1.msra.mxu0 0.0
      %561 = vmatprep.subr.mxu0 0.0
      %562 = vmatpush1.msra.mxu0 0.0
      %563 = vmatprep.subr.mxu0 0.0
      %564 = vmatpush1.msra.mxu0 0.0
      %565 = vmatprep.subr.mxu0 0.0
      %566 = vmatpush1.msra.mxu0 %v462
      %567 = vmatprep.subr.mxu0 0.0
      %568 = vmatpush2.msra.mxu0 0.0
      %569 = vmatprep.subr.mxu0 0.0
      %570 = vmatpush2.msra.mxu0 0.0
      %571 = vmatprep.subr.mxu0 0.0
      %572 = vmatpush2.msra.mxu0 0.0
      %573 = vmatprep.subr.mxu0 0.0
      %574 = vmatpush2.msra.mxu0 0.0
      %575 = vmatprep.subr.mxu0 0.0
      %576 = vmatpush2.msra.mxu0 0.0
      %577 = vmatprep.subr.mxu0 0.0
      %578 = vmatpush2.msra.mxu0 0.0
      %579 = vmatprep.subr.mxu0 0.0
      %580 = vmatpush2.msra.mxu0 0.0
      %581 = vmatprep.subr.mxu0 0.0
      %582 = vmatpush2.msra.mxu0 0.0
      %583 = vmatprep.subr.mxu0 0.0
      %584 = vmatpush2.msra.mxu0 0.0
      %585 = vmatprep.subr.mxu0 0.0
      %586 = vmatpush2.msra.mxu0 0.0
      %587 = vmatprep.subr.mxu0 0.0
      %588 = vmatpush2.msra.mxu0 0.0
      %589 = vmatprep.subr.mxu0 0.0
      %590 = vmatpush2.msra.mxu0 0.0
      %591 = vmatprep.subr.mxu0 0.0
      %592 = vmatpush2.msra.mxu0 0.0
      %593 = vmatprep.subr.mxu0 0.0
      %594 = vmatpush2.msra.mxu0 0.0
      %595 = vmatprep.subr.mxu0 0.0
      %596 = vmatpush2.msra.mxu0 0.0
      %597 = vmatprep.subr.mxu0 0.0
      %598 = vmatpush2.msra.mxu0 0.0
      %599 = vmatprep.mubr.f32.mxu0 0.0
      %600 = vmatmul.mubr.f32.gmra.mxu0 %v456
      %v601 = vpop.f32.mrf.mxu0
      %v602 = vadd.f32 0.0, %v601
      %v603 = vpop.f32.mrf.mxu0
      %604 = vdwg.mxu0
      %v605 = vadd.f32 %v437, %v531
      %v606 = vadd.f32 %v438, %v533
      %v607 = vadd.f32 %v439, %v602
      %608 = vst [vmem:[#allocation2] sm:$0xff] %v605
      %609 = vst [vmem:[#allocation2 + $0x8] sm:$0xff] %v606
      %610 = vst [vmem:[#allocation2 + $0x10] sm:$0xff] %v607
      %v611 = vld [vmem:[#allocation2] sm:$0xff]
      %v612 = vld [vmem:[#allocation2 + $0x8] sm:$0xff]
      %v613 = vld [vmem:[#allocation2 + $0x10] sm:$0xff]
      %s614 = scalar_lea.vmem %s243, 16
      %v615 = vld [vmem:[%s614] sm:$0xff]
      %616 = vrot.lane.b32.xlu0 %v267, 126
      %v617 = vpop.permute.xlu0 %616
      %618 = vrot.lane.b32.xlu0 %v278, 126
      %v619 = vpop.permute.xlu0 %618
      %620 = vrot.lane.b32.xlu0 %v268, 126
      %v621 = vpop.permute.xlu0 %620
      %622 = vrot.lane.b32.xlu0 %v442, 126
      %v623 = vpop.permute.xlu0 %622
      %vm624 = vcmask 1031168
      %v625 = vsel %vm624, %v617, %v619
      %v626 = vsel %vm624, %v619, %v621
      %v627 = vsel %vm624, %v621, %v623
      %v629 = vsel %vm279, %v615, 0
      %v631 = vsel %vm283, %v625, 0
      %v633 = vsel %vm283, %v626, 0
      %v635 = vsel %vm283, %v627, 0
      %637 = vmatprep.subr.mxu0 0.0
      %638 = vmatpush1.msra.mxu0 0.0
      %639 = vmatprep.subr.mxu0 0.0
      %640 = vmatpush1.msra.mxu0 0.0
      %641 = vmatprep.subr.mxu0 0.0
      %642 = vmatpush1.msra.mxu0 0.0
      %643 = vmatprep.subr.mxu0 0.0
      %644 = vmatpush1.msra.mxu0 0.0
      %645 = vmatprep.subr.mxu0 0.0
      %646 = vmatpush1.msra.mxu0 0.0
      %647 = vmatprep.subr.mxu0 0.0
      %648 = vmatpush1.msra.mxu0 0.0
      %649 = vmatprep.subr.mxu0 0.0
      %650 = vmatpush1.msra.mxu0 0.0
      %651 = vmatprep.subr.mxu0 0.0
      %652 = vmatpush1.msra.mxu0 0.0
      %653 = vmatprep.subr.mxu0 0.0
      %654 = vmatpush1.msra.mxu0 0.0
      %655 = vmatprep.subr.mxu0 0.0
      %656 = vmatpush1.msra.mxu0 0.0
      %657 = vmatprep.subr.mxu0 0.0
      %658 = vmatpush1.msra.mxu0 0.0
      %659 = vmatprep.subr.mxu0 0.0
      %660 = vmatpush1.msra.mxu0 0.0
      %661 = vmatprep.subr.mxu0 0.0
      %662 = vmatpush1.msra.mxu0 0.0
      %663 = vmatprep.subr.mxu0 0.0
      %664 = vmatpush1.msra.mxu0 0.0
      %665 = vmatprep.subr.mxu0 0.0
      %666 = vmatpush1.msra.mxu0 0.0
      %667 = vmatprep.subr.mxu0 %v633
      %668 = vmatpush1.msra.mxu0 %v631
      %669 = vmatprep.subr.mxu0 0.0
      %670 = vmatpush2.msra.mxu0 0.0
      %671 = vmatprep.subr.mxu0 0.0
      %672 = vmatpush2.msra.mxu0 0.0
      %673 = vmatprep.subr.mxu0 0.0
      %674 = vmatpush2.msra.mxu0 0.0
      %675 = vmatprep.subr.mxu0 0.0
      %676 = vmatpush2.msra.mxu0 0.0
      %677 = vmatprep.subr.mxu0 0.0
      %678 = vmatpush2.msra.mxu0 0.0
      %679 = vmatprep.subr.mxu0 0.0
      %680 = vmatpush2.msra.mxu0 0.0
      %681 = vmatprep.subr.mxu0 0.0
      %682 = vmatpush2.msra.mxu0 0.0
      %683 = vmatprep.subr.mxu0 0.0
      %684 = vmatpush2.msra.mxu0 0.0
      %685 = vmatprep.subr.mxu0 0.0
      %686 = vmatpush2.msra.mxu0 0.0
      %687 = vmatprep.subr.mxu0 0.0
      %688 = vmatpush2.msra.mxu0 0.0
      %689 = vmatprep.subr.mxu0 0.0
      %690 = vmatpush2.msra.mxu0 0.0
      %691 = vmatprep.subr.mxu0 0.0
      %692 = vmatpush2.msra.mxu0 0.0
      %693 = vmatprep.subr.mxu0 0.0
      %694 = vmatpush2.msra.mxu0 0.0
      %695 = vmatprep.subr.mxu0 0.0
      %696 = vmatpush2.msra.mxu0 0.0
      %697 = vmatprep.subr.mxu0 0.0
      %698 = vmatpush2.msra.mxu0 0.0
      %699 = vmatprep.subr.mxu0 0.0
      %700 = vmatpush2.msra.mxu0 0.0
      %701 = vmatprep.mubr.f32.mxu0 0.0
      %702 = vmatmul.mubr.f32.gmra.mxu0 %v629
      %v703 = vpop.f32.mrf.mxu0
      %v704 = vadd.f32 0.0, %v703
      %v705 = vpop.f32.mrf.mxu0
      %v706 = vadd.f32 0.0, %v705
      %707 = vdwg.mxu0
      %708 = vmatprep.subr.mxu0 0.0
      %709 = vmatpush1.msra.mxu0 0.0
      %710 = vmatprep.subr.mxu0 0.0
      %711 = vmatpush1.msra.mxu0 0.0
      %712 = vmatprep.subr.mxu0 0.0
      %713 = vmatpush1.msra.mxu0 0.0
      %714 = vmatprep.subr.mxu0 0.0
      %715 = vmatpush1.msra.mxu0 0.0
      %716 = vmatprep.subr.mxu0 0.0
      %717 = vmatpush1.msra.mxu0 0.0
      %718 = vmatprep.subr.mxu0 0.0
      %719 = vmatpush1.msra.mxu0 0.0
      %720 = vmatprep.subr.mxu0 0.0
      %721 = vmatpush1.msra.mxu0 0.0
      %722 = vmatprep.subr.mxu0 0.0
      %723 = vmatpush1.msra.mxu0 0.0
      %724 = vmatprep.subr.mxu0 0.0
      %725 = vmatpush1.msra.mxu0 0.0
      %726 = vmatprep.subr.mxu0 0.0
      %727 = vmatpush1.msra.mxu0 0.0
      %728 = vmatprep.subr.mxu0 0.0
      %729 = vmatpush1.msra.mxu0 0.0
      %730 = vmatprep.subr.mxu0 0.0
      %731 = vmatpush1.msra.mxu0 0.0
      %732 = vmatprep.subr.mxu0 0.0
      %733 = vmatpush1.msra.mxu0 0.0
      %734 = vmatprep.subr.mxu0 0.0
      %735 = vmatpush1.msra.mxu0 0.0
      %736 = vmatprep.subr.mxu0 0.0
      %737 = vmatpush1.msra.mxu0 0.0
      %738 = vmatprep.subr.mxu0 0.0
      %739 = vmatpush1.msra.mxu0 %v635
      %740 = vmatprep.subr.mxu0 0.0
      %741 = vmatpush2.msra.mxu0 0.0
      %742 = vmatprep.subr.mxu0 0.0
      %743 = vmatpush2.msra.mxu0 0.0
      %744 = vmatprep.subr.mxu0 0.0
      %745 = vmatpush2.msra.mxu0 0.0
      %746 = vmatprep.subr.mxu0 0.0
      %747 = vmatpush2.msra.mxu0 0.0
      %748 = vmatprep.subr.mxu0 0.0
      %749 = vmatpush2.msra.mxu0 0.0
      %750 = vmatprep.subr.mxu0 0.0
      %751 = vmatpush2.msra.mxu0 0.0
      %752 = vmatprep.subr.mxu0 0.0
      %753 = vmatpush2.msra.mxu0 0.0
      %754 = vmatprep.subr.mxu0 0.0
      %755 = vmatpush2.msra.mxu0 0.0
      %756 = vmatprep.subr.mxu0 0.0
      %757 = vmatpush2.msra.mxu0 0.0
      %758 = vmatprep.subr.mxu0 0.0
      %759 = vmatpush2.msra.mxu0 0.0
      %760 = vmatprep.subr.mxu0 0.0
      %761 = vmatpush2.msra.mxu0 0.0
      %762 = vmatprep.subr.mxu0 0.0
      %763 = vmatpush2.msra.mxu0 0.0
      %764 = vmatprep.subr.mxu0 0.0
      %765 = vmatpush2.msra.mxu0 0.0
      %766 = vmatprep.subr.mxu0 0.0
      %767 = vmatpush2.msra.mxu0 0.0
      %768 = vmatprep.subr.mxu0 0.0
      %769 = vmatpush2.msra.mxu0 0.0
      %770 = vmatprep.subr.mxu0 0.0
      %771 = vmatpush2.msra.mxu0 0.0
      %772 = vmatprep.mubr.f32.mxu0 0.0
      %773 = vmatmul.mubr.f32.gmra.mxu0 %v629
      %v774 = vpop.f32.mrf.mxu0
      %v775 = vadd.f32 0.0, %v774
      %v776 = vpop.f32.mrf.mxu0
      %777 = vdwg.mxu0
      %v778 = vadd.f32 %v611, %v704
      %v779 = vadd.f32 %v612, %v706
      %v780 = vadd.f32 %v613, %v775
      %781 = vst [vmem:[#allocation2] sm:$0xff] %v778
      %782 = vst [vmem:[#allocation2 + $0x8] sm:$0xff] %v779
      %783 = vst [vmem:[#allocation2 + $0x10] sm:$0xff] %v780
      %v784 = vld [vmem:[#allocation2] sm:$0xff]
      %v785 = vld [vmem:[#allocation2 + $0x8] sm:$0xff]
      %v786 = vld [vmem:[#allocation2 + $0x10] sm:$0xff]
      %s787 = scalar_lea.vmem %s243, 24
      %v788 = vld [vmem:[%s787] sm:$0xff]
      %789 = vrot.lane.b32.xlu0 %v267, 110
      %v790 = vpop.permute.xlu0 %789
      %791 = vrot.lane.b32.xlu0 %v278, 110
      %v792 = vpop.permute.xlu0 %791
      %793 = vrot.lane.b32.xlu0 %v268, 110
      %v794 = vpop.permute.xlu0 %793
      %795 = vrot.lane.b32.xlu0 %v442, 110
      %v796 = vpop.permute.xlu0 %795
      %vm797 = vcmask 900096
      %v798 = vsel %vm797, %v790, %v792
      %v799 = vsel %vm797, %v792, %v794
      %v800 = vsel %vm797, %v794, %v796
      %v802 = vsel %vm279, %v788, 0
      %v804 = vsel %vm283, %v798, 0
      %v806 = vsel %vm283, %v799, 0
      %v808 = vsel %vm283, %v800, 0
      %810 = vmatprep.subr.mxu0 0.0
      %811 = vmatpush1.msra.mxu0 0.0
      %812 = vmatprep.subr.mxu0 0.0
      %813 = vmatpush1.msra.mxu0 0.0
      %814 = vmatprep.subr.mxu0 0.0
      %815 = vmatpush1.msra.mxu0 0.0
      %816 = vmatprep.subr.mxu0 0.0
      %817 = vmatpush1.msra.mxu0 0.0
      %818 = vmatprep.subr.mxu0 0.0
      %819 = vmatpush1.msra.mxu0 0.0
      %820 = vmatprep.subr.mxu0 0.0
      %821 = vmatpush1.msra.mxu0 0.0
      %822 = vmatprep.subr.mxu0 0.0
      %823 = vmatpush1.msra.mxu0 0.0
      %824 = vmatprep.subr.mxu0 0.0
      %825 = vmatpush1.msra.mxu0 0.0
      %826 = vmatprep.subr.mxu0 0.0
      %827 = vmatpush1.msra.mxu0 0.0
      %828 = vmatprep.subr.mxu0 0.0
      %829 = vmatpush1.msra.mxu0 0.0
      %830 = vmatprep.subr.mxu0 0.0
      %831 = vmatpush1.msra.mxu0 0.0
      %832 = vmatprep.subr.mxu0 0.0
      %833 = vmatpush1.msra.mxu0 0.0
      %834 = vmatprep.subr.mxu0 0.0
      %835 = vmatpush1.msra.mxu0 0.0
      %836 = vmatprep.subr.mxu0 0.0
      %837 = vmatpush1.msra.mxu0 0.0
      %838 = vmatprep.subr.mxu0 0.0
      %839 = vmatpush1.msra.mxu0 0.0
      %840 = vmatprep.subr.mxu0 %v806
      %841 = vmatpush1.msra.mxu0 %v804
      %842 = vmatprep.subr.mxu0 0.0
      %843 = vmatpush2.msra.mxu0 0.0
      %844 = vmatprep.subr.mxu0 0.0
      %845 = vmatpush2.msra.mxu0 0.0
      %846 = vmatprep.subr.mxu0 0.0
      %847 = vmatpush2.msra.mxu0 0.0
      %848 = vmatprep.subr.mxu0 0.0
      %849 = vmatpush2.msra.mxu0 0.0
      %850 = vmatprep.subr.mxu0 0.0
      %851 = vmatpush2.msra.mxu0 0.0
      %852 = vmatprep.subr.mxu0 0.0
      %853 = vmatpush2.msra.mxu0 0.0
      %854 = vmatprep.subr.mxu0 0.0
      %855 = vmatpush2.msra.mxu0 0.0
      %856 = vmatprep.subr.mxu0 0.0
      %857 = vmatpush2.msra.mxu0 0.0
      %858 = vmatprep.subr.mxu0 0.0
      %859 = vmatpush2.msra.mxu0 0.0
      %860 = vmatprep.subr.mxu0 0.0
      %861 = vmatpush2.msra.mxu0 0.0
      %862 = vmatprep.subr.mxu0 0.0
      %863 = vmatpush2.msra.mxu0 0.0
      %864 = vmatprep.subr.mxu0 0.0
      %865 = vmatpush2.msra.mxu0 0.0
      %866 = vmatprep.subr.mxu0 0.0
      %867 = vmatpush2.msra.mxu0 0.0
      %868 = vmatprep.subr.mxu0 0.0
      %869 = vmatpush2.msra.mxu0 0.0
      %870 = vmatprep.subr.mxu0 0.0
      %871 = vmatpush2.msra.mxu0 0.0
      %872 = vmatprep.subr.mxu0 0.0
      %873 = vmatpush2.msra.mxu0 0.0
      %874 = vmatprep.mubr.f32.mxu0 0.0
      %875 = vmatmul.mubr.f32.gmra.mxu0 %v802
      %v876 = vpop.f32.mrf.mxu0
      %v877 = vadd.f32 0.0, %v876
      %v878 = vpop.f32.mrf.mxu0
      %v879 = vadd.f32 0.0, %v878
      %880 = vdwg.mxu0
      %881 = vmatprep.subr.mxu0 0.0
      %882 = vmatpush1.msra.mxu0 0.0
      %883 = vmatprep.subr.mxu0 0.0
      %884 = vmatpush1.msra.mxu0 0.0
      %885 = vmatprep.subr.mxu0 0.0
      %886 = vmatpush1.msra.mxu0 0.0
      %887 = vmatprep.subr.mxu0 0.0
      %888 = vmatpush1.msra.mxu0 0.0
      %889 = vmatprep.subr.mxu0 0.0
      %890 = vmatpush1.msra.mxu0 0.0
      %891 = vmatprep.subr.mxu0 0.0
      %892 = vmatpush1.msra.mxu0 0.0
      %893 = vmatprep.subr.mxu0 0.0
      %894 = vmatpush1.msra.mxu0 0.0
      %895 = vmatprep.subr.mxu0 0.0
      %896 = vmatpush1.msra.mxu0 0.0
      %897 = vmatprep.subr.mxu0 0.0
      %898 = vmatpush1.msra.mxu0 0.0
      %899 = vmatprep.subr.mxu0 0.0
      %900 = vmatpush1.msra.mxu0 0.0
      %901 = vmatprep.subr.mxu0 0.0
      %902 = vmatpush1.msra.mxu0 0.0
      %903 = vmatprep.subr.mxu0 0.0
      %904 = vmatpush1.msra.mxu0 0.0
      %905 = vmatprep.subr.mxu0 0.0
      %906 = vmatpush1.msra.mxu0 0.0
      %907 = vmatprep.subr.mxu0 0.0
      %908 = vmatpush1.msra.mxu0 0.0
      %909 = vmatprep.subr.mxu0 0.0
      %910 = vmatpush1.msra.mxu0 0.0
      %911 = vmatprep.subr.mxu0 0.0
      %912 = vmatpush1.msra.mxu0 %v808
      %913 = vmatprep.subr.mxu0 0.0
      %914 = vmatpush2.msra.mxu0 0.0
      %915 = vmatprep.subr.mxu0 0.0
      %916 = vmatpush2.msra.mxu0 0.0
      %917 = vmatprep.subr.mxu0 0.0
      %918 = vmatpush2.msra.mxu0 0.0
      %919 = vmatprep.subr.mxu0 0.0
      %920 = vmatpush2.msra.mxu0 0.0
      %921 = vmatprep.subr.mxu0 0.0
      %922 = vmatpush2.msra.mxu0 0.0
      %923 = vmatprep.subr.mxu0 0.0
      %924 = vmatpush2.msra.mxu0 0.0
      %925 = vmatprep.subr.mxu0 0.0
      %926 = vmatpush2.msra.mxu0 0.0
      %927 = vmatprep.subr.mxu0 0.0
      %928 = vmatpush2.msra.mxu0 0.0
      %929 = vmatprep.subr.mxu0 0.0
      %930 = vmatpush2.msra.mxu0 0.0
      %931 = vmatprep.subr.mxu0 0.0
      %932 = vmatpush2.msra.mxu0 0.0
      %933 = vmatprep.subr.mxu0 0.0
      %934 = vmatpush2.msra.mxu0 0.0
      %935 = vmatprep.subr.mxu0 0.0
      %936 = vmatpush2.msra.mxu0 0.0
      %937 = vmatprep.subr.mxu0 0.0
      %938 = vmatpush2.msra.mxu0 0.0
      %939 = vmatprep.subr.mxu0 0.0
      %940 = vmatpush2.msra.mxu0 0.0
      %941 = vmatprep.subr.mxu0 0.0
      %942 = vmatpush2.msra.mxu0 0.0
      %943 = vmatprep.subr.mxu0 0.0
      %944 = vmatpush2.msra.mxu0 0.0
      %945 = vmatprep.mubr.f32.mxu0 0.0
      %946 = vmatmul.mubr.f32.gmra.mxu0 %v802
      %v947 = vpop.f32.mrf.mxu0
      %v948 = vadd.f32 0.0, %v947
      %v949 = vpop.f32.mrf.mxu0
      %950 = vdwg.mxu0
      %v951 = vadd.f32 %v784, %v877
      %v952 = vadd.f32 %v785, %v879
      %v953 = vadd.f32 %v786, %v948
      %954 = vst [vmem:[#allocation2] sm:$0xff] %v951
      %955 = vst [vmem:[#allocation2 + $0x8] sm:$0xff] %v952
      %956 = vst [vmem:[#allocation2 + $0x10] sm:$0xff] %v953
      %v957 = vld [vmem:[#allocation2] sm:$0xff]
      %v958 = vld [vmem:[#allocation2 + $0x8] sm:$0xff]
      %v959 = vld [vmem:[#allocation2 + $0x10] sm:$0xff]
      %s960 = scalar_lea.vmem %s243, 32
      %v961 = vld [vmem:[%s960] sm:$0xff]
      %962 = vrot.lane.b32.xlu0 %v267, 109
      %v963 = vpop.permute.xlu0 %962
      %964 = vrot.lane.b32.xlu0 %v278, 109
      %v965 = vpop.permute.xlu0 %964
      %966 = vrot.lane.b32.xlu0 %v268, 109
      %v967 = vpop.permute.xlu0 %966
      %968 = vrot.lane.b32.xlu0 %v442, 109
      %v969 = vpop.permute.xlu0 %968
      %vm970 = vcmask 891904
      %v971 = vsel %vm970, %v963, %v965
      %v972 = vsel %vm970, %v965, %v967
      %v973 = vsel %vm970, %v967, %v969
      %v975 = vsel %vm279, %v961, 0
      %v977 = vsel %vm283, %v971, 0
      %v979 = vsel %vm283, %v972, 0
      %v981 = vsel %vm283, %v973, 0
      %983 = vmatprep.subr.mxu0 0.0
      %984 = vmatpush1.msra.mxu0 0.0
      %985 = vmatprep.subr.mxu0 0.0
      %986 = vmatpush1.msra.mxu0 0.0
      %987 = vmatprep.subr.mxu0 0.0
      %988 = vmatpush1.msra.mxu0 0.0
      %989 = vmatprep.subr.mxu0 0.0
      %990 = vmatpush1.msra.mxu0 0.0
      %991 = vmatprep.subr.mxu0 0.0
      %992 = vmatpush1.msra.mxu0 0.0
      %993 = vmatprep.subr.mxu0 0.0
      %994 = vmatpush1.msra.mxu0 0.0
      %995 = vmatprep.subr.mxu0 0.0
      %996 = vmatpush1.msra.mxu0 0.0
      %997 = vmatprep.subr.mxu0 0.0
      %998 = vmatpush1.msra.mxu0 0.0
      %999 = vmatprep.subr.mxu0 0.0
      %1000 = vmatpush1.msra.mxu0 0.0
      %1001 = vmatprep.subr.mxu0 0.0
      %1002 = vmatpush1.msra.mxu0 0.0
      %1003 = vmatprep.subr.mxu0 0.0
      %1004 = vmatpush1.msra.mxu0 0.0
      %1005 = vmatprep.subr.mxu0 0.0
      %1006 = vmatpush1.msra.mxu0 0.0
      %1007 = vmatprep.subr.mxu0 0.0
      %1008 = vmatpush1.msra.mxu0 0.0
      %1009 = vmatprep.subr.mxu0 0.0
      %1010 = vmatpush1.msra.mxu0 0.0
      %1011 = vmatprep.subr.mxu0 0.0
      %1012 = vmatpush1.msra.mxu0 0.0
      %1013 = vmatprep.subr.mxu0 %v979
      %1014 = vmatpush1.msra.mxu0 %v977
      %1015 = vmatprep.subr.mxu0 0.0
      %1016 = vmatpush2.msra.mxu0 0.0
      %1017 = vmatprep.subr.mxu0 0.0
      %1018 = vmatpush2.msra.mxu0 0.0
      %1019 = vmatprep.subr.mxu0 0.0
      %1020 = vmatpush2.msra.mxu0 0.0
      %1021 = vmatprep.subr.mxu0 0.0
      %1022 = vmatpush2.msra.mxu0 0.0
      %1023 = vmatprep.subr.mxu0 0.0
      %1024 = vmatpush2.msra.mxu0 0.0
      %1025 = vmatprep.subr.mxu0 0.0
      %1026 = vmatpush2.msra.mxu0 0.0
      %1027 = vmatprep.subr.mxu0 0.0
      %1028 = vmatpush2.msra.mxu0 0.0
      %1029 = vmatprep.subr.mxu0 0.0
      %1030 = vmatpush2.msra.mxu0 0.0
      %1031 = vmatprep.subr.mxu0 0.0
      %1032 = vmatpush2.msra.mxu0 0.0
      %1033 = vmatprep.subr.mxu0 0.0
      %1034 = vmatpush2.msra.mxu0 0.0
      %1035 = vmatprep.subr.mxu0 0.0
      %1036 = vmatpush2.msra.mxu0 0.0
      %1037 = vmatprep.subr.mxu0 0.0
      %1038 = vmatpush2.msra.mxu0 0.0
      %1039 = vmatprep.subr.mxu0 0.0
      %1040 = vmatpush2.msra.mxu0 0.0
      %1041 = vmatprep.subr.mxu0 0.0
      %1042 = vmatpush2.msra.mxu0 0.0
      %1043 = vmatprep.subr.mxu0 0.0
      %1044 = vmatpush2.msra.mxu0 0.0
      %1045 = vmatprep.subr.mxu0 0.0
      %1046 = vmatpush2.msra.mxu0 0.0
      %1047 = vmatprep.mubr.f32.mxu0 0.0
      %1048 = vmatmul.mubr.f32.gmra.mxu0 %v975
      %v1049 = vpop.f32.mrf.mxu0
      %v1050 = vadd.f32 0.0, %v1049
      %v1051 = vpop.f32.mrf.mxu0
      %v1052 = vadd.f32 0.0, %v1051
      %1053 = vdwg.mxu0
      %1054 = vmatprep.subr.mxu0 0.0
      %1055 = vmatpush1.msra.mxu0 0.0
      %1056 = vmatprep.subr.mxu0 0.0
      %1057 = vmatpush1.msra.mxu0 0.0
      %1058 = vmatprep.subr.mxu0 0.0
      %1059 = vmatpush1.msra.mxu0 0.0
      %1060 = vmatprep.subr.mxu0 0.0
      %1061 = vmatpush1.msra.mxu0 0.0
      %1062 = vmatprep.subr.mxu0 0.0
      %1063 = vmatpush1.msra.mxu0 0.0
      %1064 = vmatprep.subr.mxu0 0.0
      %1065 = vmatpush1.msra.mxu0 0.0
      %1066 = vmatprep.subr.mxu0 0.0
      %1067 = vmatpush1.msra.mxu0 0.0
      %1068 = vmatprep.subr.mxu0 0.0
      %1069 = vmatpush1.msra.mxu0 0.0
      %1070 = vmatprep.subr.mxu0 0.0
      %1071 = vmatpush1.msra.mxu0 0.0
      %1072 = vmatprep.subr.mxu0 0.0
      %1073 = vmatpush1.msra.mxu0 0.0
      %1074 = vmatprep.subr.mxu0 0.0
      %1075 = vmatpush1.msra.mxu0 0.0
      %1076 = vmatprep.subr.mxu0 0.0
      %1077 = vmatpush1.msra.mxu0 0.0
      %1078 = vmatprep.subr.mxu0 0.0
      %1079 = vmatpush1.msra.mxu0 0.0
      %1080 = vmatprep.subr.mxu0 0.0
      %1081 = vmatpush1.msra.mxu0 0.0
      %1082 = vmatprep.subr.mxu0 0.0
      %1083 = vmatpush1.msra.mxu0 0.0
      %1084 = vmatprep.subr.mxu0 0.0
      %1085 = vmatpush1.msra.mxu0 %v981
      %1086 = vmatprep.subr.mxu0 0.0
      %1087 = vmatpush2.msra.mxu0 0.0
      %1088 = vmatprep.subr.mxu0 0.0
      %1089 = vmatpush2.msra.mxu0 0.0
      %1090 = vmatprep.subr.mxu0 0.0
      %1091 = vmatpush2.msra.mxu0 0.0
      %1092 = vmatprep.subr.mxu0 0.0
      %1093 = vmatpush2.msra.mxu0 0.0
      %1094 = vmatprep.subr.mxu0 0.0
      %1095 = vmatpush2.msra.mxu0 0.0
      %1096 = vmatprep.subr.mxu0 0.0
      %1097 = vmatpush2.msra.mxu0 0.0
      %1098 = vmatprep.subr.mxu0 0.0
      %1099 = vmatpush2.msra.mxu0 0.0
      %1100 = vmatprep.subr.mxu0 0.0
      %1101 = vmatpush2.msra.mxu0 0.0
      %1102 = vmatprep.subr.mxu0 0.0
      %1103 = vmatpush2.msra.mxu0 0.0
      %1104 = vmatprep.subr.mxu0 0.0
      %1105 = vmatpush2.msra.mxu0 0.0
      %1106 = vmatprep.subr.mxu0 0.0
      %1107 = vmatpush2.msra.mxu0 0.0
      %1108 = vmatprep.subr.mxu0 0.0
      %1109 = vmatpush2.msra.mxu0 0.0
      %1110 = vmatprep.subr.mxu0 0.0
      %1111 = vmatpush2.msra.mxu0 0.0
      %1112 = vmatprep.subr.mxu0 0.0
      %1113 = vmatpush2.msra.mxu0 0.0
      %1114 = vmatprep.subr.mxu0 0.0
      %1115 = vmatpush2.msra.mxu0 0.0
      %1116 = vmatprep.subr.mxu0 0.0
      %1117 = vmatpush2.msra.mxu0 0.0
      %1118 = vmatprep.mubr.f32.mxu0 0.0
      %1119 = vmatmul.mubr.f32.gmra.mxu0 %v975
      %v1120 = vpop.f32.mrf.mxu0
      %v1121 = vadd.f32 0.0, %v1120
      %v1122 = vpop.f32.mrf.mxu0
      %1123 = vdwg.mxu0
      %v1124 = vadd.f32 %v957, %v1050
      %v1125 = vadd.f32 %v958, %v1052
      %v1126 = vadd.f32 %v959, %v1121
      %1127 = vst [vmem:[#allocation2] sm:$0xff] %v1124
      %1128 = vst [vmem:[#allocation2 + $0x8] sm:$0xff] %v1125
      %1129 = vst [vmem:[#allocation2 + $0x10] sm:$0xff] %v1126
      %v1130 = vld [vmem:[#allocation2] sm:$0xff]
      %v1131 = vld [vmem:[#allocation2 + $0x8] sm:$0xff]
      %v1132 = vld [vmem:[#allocation2 + $0x10] sm:$0xff]
      %s1133 = scalar_lea.vmem %s243, 40
      %v1134 = vld [vmem:[%s1133] sm:$0xff]
      %1135 = vrot.lane.b32.xlu0 %v267, 108
      %v1136 = vpop.permute.xlu0 %1135
      %1137 = vrot.lane.b32.xlu0 %v278, 108
      %v1138 = vpop.permute.xlu0 %1137
      %1139 = vrot.lane.b32.xlu0 %v268, 108
      %v1140 = vpop.permute.xlu0 %1139
      %1141 = vrot.lane.b32.xlu0 %v442, 108
      %v1142 = vpop.permute.xlu0 %1141
      %vm1143 = vcmask 883712
      %v1144 = vsel %vm1143, %v1136, %v1138
      %v1145 = vsel %vm1143, %v1138, %v1140
      %v1146 = vsel %vm1143, %v1140, %v1142
      %v1148 = vsel %vm279, %v1134, 0
      %v1150 = vsel %vm283, %v1144, 0
      %v1152 = vsel %vm283, %v1145, 0
      %v1154 = vsel %vm283, %v1146, 0
      %1156 = vmatprep.subr.mxu0 0.0
      %1157 = vmatpush1.msra.mxu0 0.0
      %1158 = vmatprep.subr.mxu0 0.0
      %1159 = vmatpush1.msra.mxu0 0.0
      %1160 = vmatprep.subr.mxu0 0.0
      %1161 = vmatpush1.msra.mxu0 0.0
      %1162 = vmatprep.subr.mxu0 0.0
      %1163 = vmatpush1.msra.mxu0 0.0
      %1164 = vmatprep.subr.mxu0 0.0
      %1165 = vmatpush1.msra.mxu0 0.0
      %1166 = vmatprep.subr.mxu0 0.0
      %1167 = vmatpush1.msra.mxu0 0.0
      %1168 = vmatprep.subr.mxu0 0.0
      %1169 = vmatpush1.msra.mxu0 0.0
      %1170 = vmatprep.subr.mxu0 0.0
      %1171 = vmatpush1.msra.mxu0 0.0
      %1172 = vmatprep.subr.mxu0 0.0
      %1173 = vmatpush1.msra.mxu0 0.0
      %1174 = vmatprep.subr.mxu0 0.0
      %1175 = vmatpush1.msra.mxu0 0.0
      %1176 = vmatprep.subr.mxu0 0.0
      %1177 = vmatpush1.msra.mxu0 0.0
      %1178 = vmatprep.subr.mxu0 0.0
      %1179 = vmatpush1.msra.mxu0 0.0
      %1180 = vmatprep.subr.mxu0 0.0
      %1181 = vmatpush1.msra.mxu0 0.0
      %1182 = vmatprep.subr.mxu0 0.0
      %1183 = vmatpush1.msra.mxu0 0.0
      %1184 = vmatprep.subr.mxu0 0.0
      %1185 = vmatpush1.msra.mxu0 0.0
      %1186 = vmatprep.subr.mxu0 %v1152
      %1187 = vmatpush1.msra.mxu0 %v1150
      %1188 = vmatprep.subr.mxu0 0.0
      %1189 = vmatpush2.msra.mxu0 0.0
      %1190 = vmatprep.subr.mxu0 0.0
      %1191 = vmatpush2.msra.mxu0 0.0
      %1192 = vmatprep.subr.mxu0 0.0
      %1193 = vmatpush2.msra.mxu0 0.0
      %1194 = vmatprep.subr.mxu0 0.0
      %1195 = vmatpush2.msra.mxu0 0.0
      %1196 = vmatprep.subr.mxu0 0.0
      %1197 = vmatpush2.msra.mxu0 0.0
      %1198 = vmatprep.subr.mxu0 0.0
      %1199 = vmatpush2.msra.mxu0 0.0
      %1200 = vmatprep.subr.mxu0 0.0
      %1201 = vmatpush2.msra.mxu0 0.0
      %1202 = vmatprep.subr.mxu0 0.0
      %1203 = vmatpush2.msra.mxu0 0.0
      %1204 = vmatprep.subr.mxu0 0.0
      %1205 = vmatpush2.msra.mxu0 0.0
      %1206 = vmatprep.subr.mxu0 0.0
      %1207 = vmatpush2.msra.mxu0 0.0
      %1208 = vmatprep.subr.mxu0 0.0
      %1209 = vmatpush2.msra.mxu0 0.0
      %1210 = vmatprep.subr.mxu0 0.0
      %1211 = vmatpush2.msra.mxu0 0.0
      %1212 = vmatprep.subr.mxu0 0.0
      %1213 = vmatpush2.msra.mxu0 0.0
      %1214 = vmatprep.subr.mxu0 0.0
      %1215 = vmatpush2.msra.mxu0 0.0
      %1216 = vmatprep.subr.mxu0 0.0
      %1217 = vmatpush2.msra.mxu0 0.0
      %1218 = vmatprep.subr.mxu0 0.0
      %1219 = vmatpush2.msra.mxu0 0.0
      %1220 = vmatprep.mubr.f32.mxu0 0.0
      %1221 = vmatmul.mubr.f32.gmra.mxu0 %v1148
      %v1222 = vpop.f32.mrf.mxu0
      %v1223 = vadd.f32 0.0, %v1222
      %v1224 = vpop.f32.mrf.mxu0
      %v1225 = vadd.f32 0.0, %v1224
      %1226 = vdwg.mxu0
      %1227 = vmatprep.subr.mxu0 0.0
      %1228 = vmatpush1.msra.mxu0 0.0
      %1229 = vmatprep.subr.mxu0 0.0
      %1230 = vmatpush1.msra.mxu0 0.0
      %1231 = vmatprep.subr.mxu0 0.0
      %1232 = vmatpush1.msra.mxu0 0.0
      %1233 = vmatprep.subr.mxu0 0.0
      %1234 = vmatpush1.msra.mxu0 0.0
      %1235 = vmatprep.subr.mxu0 0.0
      %1236 = vmatpush1.msra.mxu0 0.0
      %1237 = vmatprep.subr.mxu0 0.0
      %1238 = vmatpush1.msra.mxu0 0.0
      %1239 = vmatprep.subr.mxu0 0.0
      %1240 = vmatpush1.msra.mxu0 0.0
      %1241 = vmatprep.subr.mxu0 0.0
      %1242 = vmatpush1.msra.mxu0 0.0
      %1243 = vmatprep.subr.mxu0 0.0
      %1244 = vmatpush1.msra.mxu0 0.0
      %1245 = vmatprep.subr.mxu0 0.0
      %1246 = vmatpush1.msra.mxu0 0.0
      %1247 = vmatprep.subr.mxu0 0.0
      %1248 = vmatpush1.msra.mxu0 0.0
      %1249 = vmatprep.subr.mxu0 0.0
      %1250 = vmatpush1.msra.mxu0 0.0
      %1251 = vmatprep.subr.mxu0 0.0
      %1252 = vmatpush1.msra.mxu0 0.0
      %1253 = vmatprep.subr.mxu0 0.0
      %1254 = vmatpush1.msra.mxu0 0.0
      %1255 = vmatprep.subr.mxu0 0.0
      %1256 = vmatpush1.msra.mxu0 0.0
      %1257 = vmatprep.subr.mxu0 0.0
      %1258 = vmatpush1.msra.mxu0 %v1154
      %1259 = vmatprep.subr.mxu0 0.0
      %1260 = vmatpush2.msra.mxu0 0.0
      %1261 = vmatprep.subr.mxu0 0.0
      %1262 = vmatpush2.msra.mxu0 0.0
      %1263 = vmatprep.subr.mxu0 0.0
      %1264 = vmatpush2.msra.mxu0 0.0
      %1265 = vmatprep.subr.mxu0 0.0
      %1266 = vmatpush2.msra.mxu0 0.0
      %1267 = vmatprep.subr.mxu0 0.0
      %1268 = vmatpush2.msra.mxu0 0.0
      %1269 = vmatprep.subr.mxu0 0.0
      %1270 = vmatpush2.msra.mxu0 0.0
      %1271 = vmatprep.subr.mxu0 0.0
      %1272 = vmatpush2.msra.mxu0 0.0
      %1273 = vmatprep.subr.mxu0 0.0
      %1274 = vmatpush2.msra.mxu0 0.0
      %1275 = vmatprep.subr.mxu0 0.0
      %1276 = vmatpush2.msra.mxu0 0.0
      %1277 = vmatprep.subr.mxu0 0.0
      %1278 = vmatpush2.msra.mxu0 0.0
      %1279 = vmatprep.subr.mxu0 0.0
      %1280 = vmatpush2.msra.mxu0 0.0
      %1281 = vmatprep.subr.mxu0 0.0
      %1282 = vmatpush2.msra.mxu0 0.0
      %1283 = vmatprep.subr.mxu0 0.0
      %1284 = vmatpush2.msra.mxu0 0.0
      %1285 = vmatprep.subr.mxu0 0.0
      %1286 = vmatpush2.msra.mxu0 0.0
      %1287 = vmatprep.subr.mxu0 0.0
      %1288 = vmatpush2.msra.mxu0 0.0
      %1289 = vmatprep.subr.mxu0 0.0
      %1290 = vmatpush2.msra.mxu0 0.0
      %1291 = vmatprep.mubr.f32.mxu0 0.0
      %1292 = vmatmul.mubr.f32.gmra.mxu0 %v1148
      %v1293 = vpop.f32.mrf.mxu0
      %v1294 = vadd.f32 0.0, %v1293
      %v1295 = vpop.f32.mrf.mxu0
      %1296 = vdwg.mxu0
      %v1297 = vadd.f32 %v1130, %v1223
      %v1298 = vadd.f32 %v1131, %v1225
      %v1299 = vadd.f32 %v1132, %v1294
      %1300 = vst [vmem:[#allocation2] sm:$0xff] %v1297
      %1301 = vst [vmem:[#allocation2 + $0x8] sm:$0xff] %v1298
      %1302 = vst [vmem:[#allocation2 + $0x10] sm:$0xff] %v1299
      %v1303 = vld [vmem:[#allocation2] sm:$0xff]
      %v1304 = vld [vmem:[#allocation2 + $0x8] sm:$0xff]
      %v1305 = vld [vmem:[#allocation2 + $0x10] sm:$0xff]
      %s1306 = scalar_lea.vmem %s243, 48
      %v1307 = vld [vmem:[%s1306] sm:$0xff]
      %1308 = vrot.lane.b32.xlu0 %v267, 92
      %v1309 = vpop.permute.xlu0 %1308
      %1310 = vrot.lane.b32.xlu0 %v278, 92
      %v1311 = vpop.permute.xlu0 %1310
      %1312 = vrot.lane.b32.xlu0 %v268, 92
      %v1313 = vpop.permute.xlu0 %1312
      %1314 = vrot.lane.b32.xlu0 %v442, 92
      %v1315 = vpop.permute.xlu0 %1314
      %vm1316 = vcmask 752640
      %v1317 = vsel %vm1316, %v1309, %v1311
      %v1318 = vsel %vm1316, %v1311, %v1313
      %v1319 = vsel %vm1316, %v1313, %v1315
      %v1321 = vsel %vm279, %v1307, 0
      %v1323 = vsel %vm283, %v1317, 0
      %v1325 = vsel %vm283, %v1318, 0
      %v1327 = vsel %vm283, %v1319, 0
      %1329 = vmatprep.subr.mxu0 0.0
      %1330 = vmatpush1.msra.mxu0 0.0
      %1331 = vmatprep.subr.mxu0 0.0
      %1332 = vmatpush1.msra.mxu0 0.0
      %1333 = vmatprep.subr.mxu0 0.0
      %1334 = vmatpush1.msra.mxu0 0.0
      %1335 = vmatprep.subr.mxu0 0.0
      %1336 = vmatpush1.msra.mxu0 0.0
      %1337 = vmatprep.subr.mxu0 0.0
      %1338 = vmatpush1.msra.mxu0 0.0
      %1339 = vmatprep.subr.mxu0 0.0
      %1340 = vmatpush1.msra.mxu0 0.0
      %1341 = vmatprep.subr.mxu0 0.0
      %1342 = vmatpush1.msra.mxu0 0.0
      %1343 = vmatprep.subr.mxu0 0.0
      %1344 = vmatpush1.msra.mxu0 0.0
      %1345 = vmatprep.subr.mxu0 0.0
      %1346 = vmatpush1.msra.mxu0 0.0
      %1347 = vmatprep.subr.mxu0 0.0
      %1348 = vmatpush1.msra.mxu0 0.0
      %1349 = vmatprep.subr.mxu0 0.0
      %1350 = vmatpush1.msra.mxu0 0.0
      %1351 = vmatprep.subr.mxu0 0.0
      %1352 = vmatpush1.msra.mxu0 0.0
      %1353 = vmatprep.subr.mxu0 0.0
      %1354 = vmatpush1.msra.mxu0 0.0
      %1355 = vmatprep.subr.mxu0 0.0
      %1356 = vmatpush1.msra.mxu0 0.0
      %1357 = vmatprep.subr.mxu0 0.0
      %1358 = vmatpush1.msra.mxu0 0.0
      %1359 = vmatprep.subr.mxu0 %v1325
      %1360 = vmatpush1.msra.mxu0 %v1323
      %1361 = vmatprep.subr.mxu0 0.0
      %1362 = vmatpush2.msra.mxu0 0.0
      %1363 = vmatprep.subr.mxu0 0.0
      %1364 = vmatpush2.msra.mxu0 0.0
      %1365 = vmatprep.subr.mxu0 0.0
      %1366 = vmatpush2.msra.mxu0 0.0
      %1367 = vmatprep.subr.mxu0 0.0
      %1368 = vmatpush2.msra.mxu0 0.0
      %1369 = vmatprep.subr.mxu0 0.0
      %1370 = vmatpush2.msra.mxu0 0.0
      %1371 = vmatprep.subr.mxu0 0.0
      %1372 = vmatpush2.msra.mxu0 0.0
      %1373 = vmatprep.subr.mxu0 0.0
      %1374 = vmatpush2.msra.mxu0 0.0
      %1375 = vmatprep.subr.mxu0 0.0
      %1376 = vmatpush2.msra.mxu0 0.0
      %1377 = vmatprep.subr.mxu0 0.0
      %1378 = vmatpush2.msra.mxu0 0.0
      %1379 = vmatprep.subr.mxu0 0.0
      %1380 = vmatpush2.msra.mxu0 0.0
      %1381 = vmatprep.subr.mxu0 0.0
      %1382 = vmatpush2.msra.mxu0 0.0
      %1383 = vmatprep.subr.mxu0 0.0
      %1384 = vmatpush2.msra.mxu0 0.0
      %1385 = vmatprep.subr.mxu0 0.0
      %1386 = vmatpush2.msra.mxu0 0.0
      %1387 = vmatprep.subr.mxu0 0.0
      %1388 = vmatpush2.msra.mxu0 0.0
      %1389 = vmatprep.subr.mxu0 0.0
      %1390 = vmatpush2.msra.mxu0 0.0
      %1391 = vmatprep.subr.mxu0 0.0
      %1392 = vmatpush2.msra.mxu0 0.0
      %1393 = vmatprep.mubr.f32.mxu0 0.0
      %1394 = vmatmul.mubr.f32.gmra.mxu0 %v1321
      %v1395 = vpop.f32.mrf.mxu0
      %v1396 = vadd.f32 0.0, %v1395
      %v1397 = vpop.f32.mrf.mxu0
      %v1398 = vadd.f32 0.0, %v1397
      %1399 = vdwg.mxu0
      %1400 = vmatprep.subr.mxu0 0.0
      %1401 = vmatpush1.msra.mxu0 0.0
      %1402 = vmatprep.subr.mxu0 0.0
      %1403 = vmatpush1.msra.mxu0 0.0
      %1404 = vmatprep.subr.mxu0 0.0
      %1405 = vmatpush1.msra.mxu0 0.0
      %1406 = vmatprep.subr.mxu0 0.0
      %1407 = vmatpush1.msra.mxu0 0.0
      %1408 = vmatprep.subr.mxu0 0.0
      %1409 = vmatpush1.msra.mxu0 0.0
      %1410 = vmatprep.subr.mxu0 0.0
      %1411 = vmatpush1.msra.mxu0 0.0
      %1412 = vmatprep.subr.mxu0 0.0
      %1413 = vmatpush1.msra.mxu0 0.0
      %1414 = vmatprep.subr.mxu0 0.0
      %1415 = vmatpush1.msra.mxu0 0.0
      %1416 = vmatprep.subr.mxu0 0.0
      %1417 = vmatpush1.msra.mxu0 0.0
      %1418 = vmatprep.subr.mxu0 0.0
      %1419 = vmatpush1.msra.mxu0 0.0
      %1420 = vmatprep.subr.mxu0 0.0
      %1421 = vmatpush1.msra.mxu0 0.0
      %1422 = vmatprep.subr.mxu0 0.0
      %1423 = vmatpush1.msra.mxu0 0.0
      %1424 = vmatprep.subr.mxu0 0.0
      %1425 = vmatpush1.msra.mxu0 0.0
      %1426 = vmatprep.subr.mxu0 0.0
      %1427 = vmatpush1.msra.mxu0 0.0
      %1428 = vmatprep.subr.mxu0 0.0
      %1429 = vmatpush1.msra.mxu0 0.0
      %1430 = vmatprep.subr.mxu0 0.0
      %1431 = vmatpush1.msra.mxu0 %v1327
      %1432 = vmatprep.subr.mxu0 0.0
      %1433 = vmatpush2.msra.mxu0 0.0
      %1434 = vmatprep.subr.mxu0 0.0
      %1435 = vmatpush2.msra.mxu0 0.0
      %1436 = vmatprep.subr.mxu0 0.0
      %1437 = vmatpush2.msra.mxu0 0.0
      %1438 = vmatprep.subr.mxu0 0.0
      %1439 = vmatpush2.msra.mxu0 0.0
      %1440 = vmatprep.subr.mxu0 0.0
      %1441 = vmatpush2.msra.mxu0 0.0
      %1442 = vmatprep.subr.mxu0 0.0
      %1443 = vmatpush2.msra.mxu0 0.0
      %1444 = vmatprep.subr.mxu0 0.0
      %1445 = vmatpush2.msra.mxu0 0.0
      %1446 = vmatprep.subr.mxu0 0.0
      %1447 = vmatpush2.msra.mxu0 0.0
      %1448 = vmatprep.subr.mxu0 0.0
      %1449 = vmatpush2.msra.mxu0 0.0
      %1450 = vmatprep.subr.mxu0 0.0
      %1451 = vmatpush2.msra.mxu0 0.0
      %1452 = vmatprep.subr.mxu0 0.0
      %1453 = vmatpush2.msra.mxu0 0.0
      %1454 = vmatprep.subr.mxu0 0.0
      %1455 = vmatpush2.msra.mxu0 0.0
      %1456 = vmatprep.subr.mxu0 0.0
      %1457 = vmatpush2.msra.mxu0 0.0
      %1458 = vmatprep.subr.mxu0 0.0
      %1459 = vmatpush2.msra.mxu0 0.0
      %1460 = vmatprep.subr.mxu0 0.0
      %1461 = vmatpush2.msra.mxu0 0.0
      %1462 = vmatprep.subr.mxu0 0.0
      %1463 = vmatpush2.msra.mxu0 0.0
      %1464 = vmatprep.mubr.f32.mxu0 0.0
      %1465 = vmatmul.mubr.f32.gmra.mxu0 %v1321
      %v1466 = vpop.f32.mrf.mxu0
      %v1467 = vadd.f32 0.0, %v1466
      %v1468 = vpop.f32.mrf.mxu0
      %1469 = vdwg.mxu0
      %v1470 = vadd.f32 %v1303, %v1396
      %v1471 = vadd.f32 %v1304, %v1398
      %v1472 = vadd.f32 %v1305, %v1467
      %1473 = vst [vmem:[#allocation2] sm:$0xff] %v1470
      %1474 = vst [vmem:[#allocation2 + $0x8] sm:$0xff] %v1471
      %1475 = vst [vmem:[#allocation2 + $0x10] sm:$0xff] %v1472
      %v1476 = vld [vmem:[#allocation2] sm:$0xff]
      %v1477 = vld [vmem:[#allocation2 + $0x8] sm:$0xff]
      %v1478 = vld [vmem:[#allocation2 + $0x10] sm:$0xff]
      %s1479 = scalar_lea.vmem %s243, 56
      %v1480 = vld [vmem:[%s1479] sm:$0xff]
      %1481 = vrot.lane.b32.xlu0 %v267, 91
      %v1482 = vpop.permute.xlu0 %1481
      %1483 = vrot.lane.b32.xlu0 %v278, 91
      %v1484 = vpop.permute.xlu0 %1483
      %1485 = vrot.lane.b32.xlu0 %v268, 91
      %v1486 = vpop.permute.xlu0 %1485
      %1487 = vrot.lane.b32.xlu0 %v442, 91
      %v1488 = vpop.permute.xlu0 %1487
      %vm1489 = vcmask 744448
      %v1490 = vsel %vm1489, %v1482, %v1484
      %v1491 = vsel %vm1489, %v1484, %v1486
      %v1492 = vsel %vm1489, %v1486, %v1488
      %v1494 = vsel %vm279, %v1480, 0
      %v1496 = vsel %vm283, %v1490, 0
      %v1498 = vsel %vm283, %v1491, 0
      %v1500 = vsel %vm283, %v1492, 0
      %1502 = vmatprep.subr.mxu0 0.0
      %1503 = vmatpush1.msra.mxu0 0.0
      %1504 = vmatprep.subr.mxu0 0.0
      %1505 = vmatpush1.msra.mxu0 0.0
      %1506 = vmatprep.subr.mxu0 0.0
      %1507 = vmatpush1.msra.mxu0 0.0
      %1508 = vmatprep.subr.mxu0 0.0
      %1509 = vmatpush1.msra.mxu0 0.0
      %1510 = vmatprep.subr.mxu0 0.0
      %1511 = vmatpush1.msra.mxu0 0.0
      %1512 = vmatprep.subr.mxu0 0.0
      %1513 = vmatpush1.msra.mxu0 0.0
      %1514 = vmatprep.subr.mxu0 0.0
      %1515 = vmatpush1.msra.mxu0 0.0
      %1516 = vmatprep.subr.mxu0 0.0
      %1517 = vmatpush1.msra.mxu0 0.0
      %1518 = vmatprep.subr.mxu0 0.0
      %1519 = vmatpush1.msra.mxu0 0.0
      %1520 = vmatprep.subr.mxu0 0.0
      %1521 = vmatpush1.msra.mxu0 0.0
      %1522 = vmatprep.subr.mxu0 0.0
      %1523 = vmatpush1.msra.mxu0 0.0
      %1524 = vmatprep.subr.mxu0 0.0
      %1525 = vmatpush1.msra.mxu0 0.0
      %1526 = vmatprep.subr.mxu0 0.0
      %1527 = vmatpush1.msra.mxu0 0.0
      %1528 = vmatprep.subr.mxu0 0.0
      %1529 = vmatpush1.msra.mxu0 0.0
      %1530 = vmatprep.subr.mxu0 0.0
      %1531 = vmatpush1.msra.mxu0 0.0
      %1532 = vmatprep.subr.mxu0 %v1498
      %1533 = vmatpush1.msra.mxu0 %v1496
      %1534 = vmatprep.subr.mxu0 0.0
      %1535 = vmatpush2.msra.mxu0 0.0
      %1536 = vmatprep.subr.mxu0 0.0
      %1537 = vmatpush2.msra.mxu0 0.0
      %1538 = vmatprep.subr.mxu0 0.0
      %1539 = vmatpush2.msra.mxu0 0.0
      %1540 = vmatprep.subr.mxu0 0.0
      %1541 = vmatpush2.msra.mxu0 0.0
      %1542 = vmatprep.subr.mxu0 0.0
      %1543 = vmatpush2.msra.mxu0 0.0
      %1544 = vmatprep.subr.mxu0 0.0
      %1545 = vmatpush2.msra.mxu0 0.0
      %1546 = vmatprep.subr.mxu0 0.0
      %1547 = vmatpush2.msra.mxu0 0.0
      %1548 = vmatprep.subr.mxu0 0.0
      %1549 = vmatpush2.msra.mxu0 0.0
      %1550 = vmatprep.subr.mxu0 0.0
      %1551 = vmatpush2.msra.mxu0 0.0
      %1552 = vmatprep.subr.mxu0 0.0
      %1553 = vmatpush2.msra.mxu0 0.0
      %1554 = vmatprep.subr.mxu0 0.0
      %1555 = vmatpush2.msra.mxu0 0.0
      %1556 = vmatprep.subr.mxu0 0.0
      %1557 = vmatpush2.msra.mxu0 0.0
      %1558 = vmatprep.subr.mxu0 0.0
      %1559 = vmatpush2.msra.mxu0 0.0
      %1560 = vmatprep.subr.mxu0 0.0
      %1561 = vmatpush2.msra.mxu0 0.0
      %1562 = vmatprep.subr.mxu0 0.0
      %1563 = vmatpush2.msra.mxu0 0.0
      %1564 = vmatprep.subr.mxu0 0.0
      %1565 = vmatpush2.msra.mxu0 0.0
      %1566 = vmatprep.mubr.f32.mxu0 0.0
      %1567 = vmatmul.mubr.f32.gmra.mxu0 %v1494
      %v1568 = vpop.f32.mrf.mxu0
      %v1569 = vadd.f32 0.0, %v1568
      %v1570 = vpop.f32.mrf.mxu0
      %v1571 = vadd.f32 0.0, %v1570
      %1572 = vdwg.mxu0
      %1573 = vmatprep.subr.mxu0 0.0
      %1574 = vmatpush1.msra.mxu0 0.0
      %1575 = vmatprep.subr.mxu0 0.0
      %1576 = vmatpush1.msra.mxu0 0.0
      %1577 = vmatprep.subr.mxu0 0.0
      %1578 = vmatpush1.msra.mxu0 0.0
      %1579 = vmatprep.subr.mxu0 0.0
      %1580 = vmatpush1.msra.mxu0 0.0
      %1581 = vmatprep.subr.mxu0 0.0
      %1582 = vmatpush1.msra.mxu0 0.0
      %1583 = vmatprep.subr.mxu0 0.0
      %1584 = vmatpush1.msra.mxu0 0.0
      %1585 = vmatprep.subr.mxu0 0.0
      %1586 = vmatpush1.msra.mxu0 0.0
      %1587 = vmatprep.subr.mxu0 0.0
      %1588 = vmatpush1.msra.mxu0 0.0
      %1589 = vmatprep.subr.mxu0 0.0
      %1590 = vmatpush1.msra.mxu0 0.0
      %1591 = vmatprep.subr.mxu0 0.0
      %1592 = vmatpush1.msra.mxu0 0.0
      %1593 = vmatprep.subr.mxu0 0.0
      %1594 = vmatpush1.msra.mxu0 0.0
      %1595 = vmatprep.subr.mxu0 0.0
      %1596 = vmatpush1.msra.mxu0 0.0
      %1597 = vmatprep.subr.mxu0 0.0
      %1598 = vmatpush1.msra.mxu0 0.0
      %1599 = vmatprep.subr.mxu0 0.0
      %1600 = vmatpush1.msra.mxu0 0.0
      %1601 = vmatprep.subr.mxu0 0.0
      %1602 = vmatpush1.msra.mxu0 0.0
      %1603 = vmatprep.subr.mxu0 0.0
      %1604 = vmatpush1.msra.mxu0 %v1500
      %1605 = vmatprep.subr.mxu0 0.0
      %1606 = vmatpush2.msra.mxu0 0.0
      %1607 = vmatprep.subr.mxu0 0.0
      %1608 = vmatpush2.msra.mxu0 0.0
      %1609 = vmatprep.subr.mxu0 0.0
      %1610 = vmatpush2.msra.mxu0 0.0
      %1611 = vmatprep.subr.mxu0 0.0
      %1612 = vmatpush2.msra.mxu0 0.0
      %1613 = vmatprep.subr.mxu0 0.0
      %1614 = vmatpush2.msra.mxu0 0.0
      %1615 = vmatprep.subr.mxu0 0.0
      %1616 = vmatpush2.msra.mxu0 0.0
      %1617 = vmatprep.subr.mxu0 0.0
      %1618 = vmatpush2.msra.mxu0 0.0
      %1619 = vmatprep.subr.mxu0 0.0
      %1620 = vmatpush2.msra.mxu0 0.0
      %1621 = vmatprep.subr.mxu0 0.0
      %1622 = vmatpush2.msra.mxu0 0.0
      %1623 = vmatprep.subr.mxu0 0.0
      %1624 = vmatpush2.msra.mxu0 0.0
      %1625 = vmatprep.subr.mxu0 0.0
      %1626 = vmatpush2.msra.mxu0 0.0
      %1627 = vmatprep.subr.mxu0 0.0
      %1628 = vmatpush2.msra.mxu0 0.0
      %1629 = vmatprep.subr.mxu0 0.0
      %1630 = vmatpush2.msra.mxu0 0.0
      %1631 = vmatprep.subr.mxu0 0.0
      %1632 = vmatpush2.msra.mxu0 0.0
      %1633 = vmatprep.subr.mxu0 0.0
      %1634 = vmatpush2.msra.mxu0 0.0
      %1635 = vmatprep.subr.mxu0 0.0
      %1636 = vmatpush2.msra.mxu0 0.0
      %1637 = vmatprep.mubr.f32.mxu0 0.0
      %1638 = vmatmul.mubr.f32.gmra.mxu0 %v1494
      %v1639 = vpop.f32.mrf.mxu0
      %v1640 = vadd.f32 0.0, %v1639
      %v1641 = vpop.f32.mrf.mxu0
      %1642 = vdwg.mxu0
      %v1643 = vadd.f32 %v1476, %v1569
      %v1644 = vadd.f32 %v1477, %v1571
      %v1645 = vadd.f32 %v1478, %v1640
      %1646 = vst [vmem:[#allocation2] sm:$0xff] %v1643
      %1647 = vst [vmem:[#allocation2 + $0x8] sm:$0xff] %v1644
      %1648 = vst [vmem:[#allocation2 + $0x10] sm:$0xff] %v1645
      %v1649 = vld [vmem:[#allocation2] sm:$0xff]
      %v1650 = vld [vmem:[#allocation2 + $0x8] sm:$0xff]
      %v1651 = vld [vmem:[#allocation2 + $0x10] sm:$0xff]
      %s1652 = scalar_lea.vmem %s243, 64
      %v1653 = vld [vmem:[%s1652] sm:$0xff]
      %1654 = vrot.lane.b32.xlu0 %v267, 90
      %v1655 = vpop.permute.xlu0 %1654
      %1656 = vrot.lane.b32.xlu0 %v278, 90
      %v1657 = vpop.permute.xlu0 %1656
      %1658 = vrot.lane.b32.xlu0 %v268, 90
      %v1659 = vpop.permute.xlu0 %1658
      %1660 = vrot.lane.b32.xlu0 %v442, 90
      %v1661 = vpop.permute.xlu0 %1660
      %vm1662 = vcmask 736256
      %v1663 = vsel %vm1662, %v1655, %v1657
      %v1664 = vsel %vm1662, %v1657, %v1659
      %v1665 = vsel %vm1662, %v1659, %v1661
      %v1667 = vsel %vm279, %v1653, 0
      %v1669 = vsel %vm283, %v1663, 0
      %v1671 = vsel %vm283, %v1664, 0
      %v1673 = vsel %vm283, %v1665, 0
      %1675 = vmatprep.subr.mxu0 0.0
      %1676 = vmatpush1.msra.mxu0 0.0
      %1677 = vmatprep.subr.mxu0 0.0
      %1678 = vmatpush1.msra.mxu0 0.0
      %1679 = vmatprep.subr.mxu0 0.0
      %1680 = vmatpush1.msra.mxu0 0.0
      %1681 = vmatprep.subr.mxu0 0.0
      %1682 = vmatpush1.msra.mxu0 0.0
      %1683 = vmatprep.subr.mxu0 0.0
      %1684 = vmatpush1.msra.mxu0 0.0
      %1685 = vmatprep.subr.mxu0 0.0
      %1686 = vmatpush1.msra.mxu0 0.0
      %1687 = vmatprep.subr.mxu0 0.0
      %1688 = vmatpush1.msra.mxu0 0.0
      %1689 = vmatprep.subr.mxu0 0.0
      %1690 = vmatpush1.msra.mxu0 0.0
      %1691 = vmatprep.subr.mxu0 0.0
      %1692 = vmatpush1.msra.mxu0 0.0
      %1693 = vmatprep.subr.mxu0 0.0
      %1694 = vmatpush1.msra.mxu0 0.0
      %1695 = vmatprep.subr.mxu0 0.0
      %1696 = vmatpush1.msra.mxu0 0.0
      %1697 = vmatprep.subr.mxu0 0.0
      %1698 = vmatpush1.msra.mxu0 0.0
      %1699 = vmatprep.subr.mxu0 0.0
      %1700 = vmatpush1.msra.mxu0 0.0
      %1701 = vmatprep.subr.mxu0 0.0
      %1702 = vmatpush1.msra.mxu0 0.0
      %1703 = vmatprep.subr.mxu0 0.0
      %1704 = vmatpush1.msra.mxu0 0.0
      %1705 = vmatprep.subr.mxu0 %v1671
      %1706 = vmatpush1.msra.mxu0 %v1669
      %1707 = vmatprep.subr.mxu0 0.0
      %1708 = vmatpush2.msra.mxu0 0.0
      %1709 = vmatprep.subr.mxu0 0.0
      %1710 = vmatpush2.msra.mxu0 0.0
      %1711 = vmatprep.subr.mxu0 0.0
      %1712 = vmatpush2.msra.mxu0 0.0
      %1713 = vmatprep.subr.mxu0 0.0
      %1714 = vmatpush2.msra.mxu0 0.0
      %1715 = vmatprep.subr.mxu0 0.0
      %1716 = vmatpush2.msra.mxu0 0.0
      %1717 = vmatprep.subr.mxu0 0.0
      %1718 = vmatpush2.msra.mxu0 0.0
      %1719 = vmatprep.subr.mxu0 0.0
      %1720 = vmatpush2.msra.mxu0 0.0
      %1721 = vmatprep.subr.mxu0 0.0
      %1722 = vmatpush2.msra.mxu0 0.0
      %1723 = vmatprep.subr.mxu0 0.0
      %1724 = vmatpush2.msra.mxu0 0.0
      %1725 = vmatprep.subr.mxu0 0.0
      %1726 = vmatpush2.msra.mxu0 0.0
      %1727 = vmatprep.subr.mxu0 0.0
      %1728 = vmatpush2.msra.mxu0 0.0
      %1729 = vmatprep.subr.mxu0 0.0
      %1730 = vmatpush2.msra.mxu0 0.0
      %1731 = vmatprep.subr.mxu0 0.0
      %1732 = vmatpush2.msra.mxu0 0.0
      %1733 = vmatprep.subr.mxu0 0.0
      %1734 = vmatpush2.msra.mxu0 0.0
      %1735 = vmatprep.subr.mxu0 0.0
      %1736 = vmatpush2.msra.mxu0 0.0
      %1737 = vmatprep.subr.mxu0 0.0
      %1738 = vmatpush2.msra.mxu0 0.0
      %1739 = vmatprep.mubr.f32.mxu0 0.0
      %1740 = vmatmul.mubr.f32.gmra.mxu0 %v1667
      %v1741 = vpop.f32.mrf.mxu0
      %v1742 = vadd.f32 0.0, %v1741
      %v1743 = vpop.f32.mrf.mxu0
      %v1744 = vadd.f32 0.0, %v1743
      %1745 = vdwg.mxu0
      %1746 = vmatprep.subr.mxu0 0.0
      %1747 = vmatpush1.msra.mxu0 0.0
      %1748 = vmatprep.subr.mxu0 0.0
      %1749 = vmatpush1.msra.mxu0 0.0
      %1750 = vmatprep.subr.mxu0 0.0
      %1751 = vmatpush1.msra.mxu0 0.0
      %1752 = vmatprep.subr.mxu0 0.0
      %1753 = vmatpush1.msra.mxu0 0.0
      %1754 = vmatprep.subr.mxu0 0.0
      %1755 = vmatpush1.msra.mxu0 0.0
      %1756 = vmatprep.subr.mxu0 0.0
      %1757 = vmatpush1.msra.mxu0 0.0
      %1758 = vmatprep.subr.mxu0 0.0
      %1759 = vmatpush1.msra.mxu0 0.0
      %1760 = vmatprep.subr.mxu0 0.0
      %1761 = vmatpush1.msra.mxu0 0.0
      %1762 = vmatprep.subr.mxu0 0.0
      %1763 = vmatpush1.msra.mxu0 0.0
      %1764 = vmatprep.subr.mxu0 0.0
      %1765 = vmatpush1.msra.mxu0 0.0
      %1766 = vmatprep.subr.mxu0 0.0
      %1767 = vmatpush1.msra.mxu0 0.0
      %1768 = vmatprep.subr.mxu0 0.0
      %1769 = vmatpush1.msra.mxu0 0.0
      %1770 = vmatprep.subr.mxu0 0.0
      %1771 = vmatpush1.msra.mxu0 0.0
      %1772 = vmatprep.subr.mxu0 0.0
      %1773 = vmatpush1.msra.mxu0 0.0
      %1774 = vmatprep.subr.mxu0 0.0
      %1775 = vmatpush1.msra.mxu0 0.0
      %1776 = vmatprep.subr.mxu0 0.0
      %1777 = vmatpush1.msra.mxu0 %v1673
      %1778 = vmatprep.subr.mxu0 0.0
      %1779 = vmatpush2.msra.mxu0 0.0
      %1780 = vmatprep.subr.mxu0 0.0
      %1781 = vmatpush2.msra.mxu0 0.0
      %1782 = vmatprep.subr.mxu0 0.0
      %1783 = vmatpush2.msra.mxu0 0.0
      %1784 = vmatprep.subr.mxu0 0.0
      %1785 = vmatpush2.msra.mxu0 0.0
      %1786 = vmatprep.subr.mxu0 0.0
      %1787 = vmatpush2.msra.mxu0 0.0
      %1788 = vmatprep.subr.mxu0 0.0
      %1789 = vmatpush2.msra.mxu0 0.0
      %1790 = vmatprep.subr.mxu0 0.0
      %1791 = vmatpush2.msra.mxu0 0.0
      %1792 = vmatprep.subr.mxu0 0.0
      %1793 = vmatpush2.msra.mxu0 0.0
      %1794 = vmatprep.subr.mxu0 0.0
      %1795 = vmatpush2.msra.mxu0 0.0
      %1796 = vmatprep.subr.mxu0 0.0
      %1797 = vmatpush2.msra.mxu0 0.0
      %1798 = vmatprep.subr.mxu0 0.0
      %1799 = vmatpush2.msra.mxu0 0.0
      %1800 = vmatprep.subr.mxu0 0.0
      %1801 = vmatpush2.msra.mxu0 0.0
      %1802 = vmatprep.subr.mxu0 0.0
      %1803 = vmatpush2.msra.mxu0 0.0
      %1804 = vmatprep.subr.mxu0 0.0
      %1805 = vmatpush2.msra.mxu0 0.0
      %1806 = vmatprep.subr.mxu0 0.0
      %1807 = vmatpush2.msra.mxu0 0.0
      %1808 = vmatprep.subr.mxu0 0.0
      %1809 = vmatpush2.msra.mxu0 0.0
      %1810 = vmatprep.mubr.f32.mxu0 0.0
      %1811 = vmatmul.mubr.f32.gmra.mxu0 %v1667
      %v1812 = vpop.f32.mrf.mxu0
      %v1813 = vadd.f32 0.0, %v1812
      %v1814 = vpop.f32.mrf.mxu0
      %1815 = vdwg.mxu0
      %v1816 = vadd.f32 %v1649, %v1742
      %v1817 = vadd.f32 %v1650, %v1744
      %v1818 = vadd.f32 %v1651, %v1813
      %1819 = vst [vmem:[#allocation2] sm:$0xff] %v1816
      %1820 = vst [vmem:[#allocation2 + $0x8] sm:$0xff] %v1817
      %1821 = vst [vmem:[#allocation2 + $0x10] sm:$0xff] %v1818
      %v1822 = vld [vmem:[#allocation2] sm:$0xff]
      %v1823 = vld [vmem:[#allocation2 + $0x8] sm:$0xff]
      %v1824 = vld [vmem:[#allocation2 + $0x10] sm:$0xff]
      %v1825 = vld [vmem:[%s247] sm:$0xff]
      %1827 = vset.pattern.permute.xlu0 0
      %1828 = vperm.xlu0 %1827, %v1825
      %v1829 = vpop.permute.xlu0 %1828
      %v1831 = vadd.f32 %v1822, %v1829
      %v1832 = vadd.f32 %v1823, %v1829
      %v1833 = vadd.f32 %v1824, %v1829
      %1834 = vst [vmem:[%s260] sm:$0xff] %v1831
      %1835 = vst [vmem:[%s260 + $0x8] sm:$0xff] %v1832
      %1836 = vst [vmem:[%s260 + $0x10] sm:$0xff] %v1833
      %s1837 = smul.u32 3, %s21
      %p1838 = scmp.lt.s32.totalorder %s20, 1
      %s1839 = scalar_select %p1838, %s20, 1
      %p1840 = scmp.lt.s32.totalorder %s19, 0
      %s1841 = scalar_select %p1840, %s19, 0
      %p1842 = scmp.lt.s32.totalorder %s1837, 2
      %s1843 = scalar_select %p1842, %s1837, 2
      %s1844 = smul.addr %s1841, 3
      %s1845 = sadd.s32 %s1843, %s1844
      %s1846 = smul.addr %s1839, 3
      %s1847 = sadd.s32 %s1845, %s1846
      %s1848 = smul.addr %s1847, 8
      %s1849 = scalar_lea.vmem %s3, %s1848
      // Predicated region
      $region33: #{_forward.1} parent=31 // pred_check
        %p1850 = pneg %p135
      $region34: #{_forward.1} parent=31 // pred_check_branch
        %1852 = sbr.rel (%p1850) target = $region36
      $region35: #{_forward.1} parent=31 // pred_region
        %s1853 = smul.u32 3, %s21
      $region36: #{_forward.1} parent=31 // pred_fallthru
        _
    $region32: #{_forward.1} parent=5 // pred_fallthru
      _
    %p1854 = scmp.le.s32.totalorder 2, %s9
    // Predicated region
    $region37: #{_forward.1} parent=5 // pred_check
      %p1855 = pneg %p1854
    $region38: #{_forward.1} parent=5 // pred_check_branch
      %1857 = sbr.rel (%p1855) target = $region40
    $region39: #{_forward.1} parent=5 // pred_region
      %s1858 = ssub.s32 %s9, 2
      // Predicated region
      $region41: #{_forward.1} parent=39 // pred_check
        %p1859 = pneg %p141
      $region42: #{_forward.1} parent=39 // pred_check_branch
        %1861 = sbr.rel (%p1859) target = $region44
      $region43: #{_forward.1} parent=39 // pred_region
        %s1862 = smul.u32 3, %s24
        %p1863 = scmp.lt.s32.totalorder %s23, 1
        %s1864 = scalar_select %p1863, %s23, 1
        %p1865 = scmp.lt.s32.totalorder %s22, 0
        %s1866 = scalar_select %p1865, %s22, 0
        %p1867 = scmp.lt.s32.totalorder %s1862, 2
        %s1868 = scalar_select %p1867, %s1862, 2
        %s1869 = smul.addr %s1866, 3
        %s1870 = sadd.s32 %s1868, %s1869
        %s1871 = smul.addr %s1864, 3
        %s1872 = sadd.s32 %s1870, %s1871
        %s1873 = smul.addr %s1872, 8
        %s1874 = scalar_lea.vmem %s3, %s1873
      $region44: #{_forward.1} parent=39 // pred_fallthru
        _
    $region40: #{_forward.1} parent=5 // pred_fallthru
      _
  $region6: #{_forward.1} parent=0 // loop_footer
    %s13 = sadd.s32 1, %s9
  $region7: #{_forward.1} parent=0 // loop_footer_branch
    %8 = sbr.rel target = $region3
  $region8: #{_forward.1} parent=0 // loop_exit
    _

</llo_original>
